<compile_context>
chip_gen: v5e
topology: v5e:2x2
jax: 0.10.0
libtpu: 0.0.40
codegen_flags: <defaults>
</compile_context>

<pallas_src>
import jax
import jax.numpy as jnp
import numpy as np
from jax import lax
from jax.experimental import pallas as pl
from jax.experimental.pallas import tpu as pltpu


# ------------------------------- Pallas kernel ------------------------------

def _build_stem_kernel(OH, OW, PH, PW, K4, CPAD, RB):
    """Fused conv7x7/s2 (merged-tap s2d matmul) + separable maxpool3x3/s2."""
    NEG = float(jnp.finfo(jnp.float32).min)
    K16 = 16 * K4                 # merged contraction depth (64 * Cin)
    NBLK = OH // RB               # RB divides OH by construction
    OW_EVEN = (OW % 2 == 0)

    def kernel(x_ref, w_ref, o_ref, acc_ref, stage_ref):
        # acc_ref  : (OH+2, PW, CPAD) f32 — column-pooled conv rows + row halo
        # stage_ref: (RB*OW, CPAD)   f32 — one conv row-block before column pool
        neg_row = jnp.full((PW, CPAD), NEG, jnp.float32)
        neg1 = jnp.full((1, CPAD), NEG, jnp.float32)

        # Only the row halo is initialized (interior rows are fully rewritten).
        acc_ref[0] = neg_row
        acc_ref[OH + 1] = neg_row

        # ---- conv: one large MXU dot per row-block + fused column pool ----
        def conv_block(blk, carry):
            r0 = blk * RB
            # Merged-tap im2col patch for RB conv rows: (RB*OW, 16*K4) bf16.
            per_dy = []
            for dy in range(4):
                dx_chunks = [
                    x_ref[0, pl.ds(r0 + dy, RB), pl.ds(dx, OW), :]
                    for dx in range(4)
                ]
                per_dy.append(jnp.concatenate(dx_chunks, axis=-1))   # (RB,OW,4*K4)
            patch = jnp.concatenate(per_dy, axis=-1)                 # (RB,OW,16*K4)
            patch = patch.reshape(RB * OW, K16)

            # Single bf16 MXU dot with f32 accumulation.
            stage_ref[...] = jnp.dot(patch, w_ref[...],
                                     preferred_element_type=jnp.float32)

            # Fused width pass of the separable 3x3/s2 max-pool (pad=1 -> -inf).
            for r in range(RB):                       # RB is small and static
                base = r * OW
                ev = stage_ref[pl.ds(base, PW, stride=2), :]           # cols 2q
                if OW_EVEN:
                    od = stage_ref[pl.ds(base + 1, PW, stride=2), :]   # cols 2q+1
                else:
                    od = jnp.concatenate(
                        [stage_ref[pl.ds(base + 1, PW - 1, stride=2), :], neg1],
                        axis=0)
                odm = jnp.concatenate([neg1, od], axis=0)[:PW, :]      # cols 2q-1
                acc_ref[r0 + 1 + r] = jnp.maximum(jnp.maximum(ev, od), odm)
            return carry

        lax.fori_loop(0, NBLK, conv_block, 0)

        # ---- height pass of the max-pool: 3-row max at stride 2 ----
        def pool_row(p, carry):
            m = jnp.maximum(acc_ref[2 * p], acc_ref[2 * p + 1])
            o_ref[0, p] = jnp.maximum(m, acc_ref[2 * p + 2])
            return carry

        lax.fori_loop(0, PH, pool_row, 0)

    return kernel


# ------------------------------- StemB forward ------------------------------

@jax.jit
def stem_b_forward(x_nchw, w_oihw):
    """StemB(pool=True): conv7x7/s2/p3 (no bias) + maxpool3x3/s2/p1 (NCHW in/out)."""
    N, C_in, H, W = x_nchw.shape
    C_out = w_oihw.shape[0]

    OH = (H - 1) // 2 + 1          # conv output height (k=7, s=2, p=3)
    OW = (W - 1) // 2 + 1
    PH = (OH - 1) // 2 + 1         # pool output height (k=3, s=2, p=1)
    PW = (OW - 1) // 2 + 1
    K4 = 4 * C_in
    K16 = 16 * K4
    CPAD = max(128, ((C_out + 127) // 128) * 128)    # lane-dense output channels

    # Conv row-block size: fill the MXU (M = RB*OW ~ 256) while dividing OH.
    RB = 1
    for cand in range(min(OH, 8), 0, -1):
        if OH % cand == 0 and cand * OW <= 256:
            RB = cand
            break

    # ---- input: bf16 early, NHWC, zero-pad, space-to-depth by 2 ----
    x = jnp.transpose(x_nchw.astype(jnp.bfloat16), (0, 2, 3, 1))
    Hp, Wp = 2 * OH + 6, 2 * OW + 6
    xp = jnp.pad(x, ((0, 0), (3, Hp - 3 - H), (3, Wp - 3 - W), (0, 0)))
    Hh, Wh = OH + 3, OW + 3
    x2 = xp.reshape(N, Hh, 2, Wh, 2, C_in)
    x2 = jnp.transpose(x2, (0, 1, 3, 2, 4, 5)).reshape(N, Hh, Wh, K4)

    # ---- weights: (Cout,Cin,7,7) -> single merged-tap (16*K4, CPAD) bf16 ----
    wt = jnp.transpose(w_oihw, (2, 3, 1, 0)).astype(jnp.float32)    # (7,7,Cin,Cout)
    w8 = jnp.pad(wt, ((0, 1), (0, 1), (0, 0), (0, 0)))              # ky/kx=7 -> zero tap
    w8 = w8.reshape(4, 2, 4, 2, C_in, C_out)                        # (dy,ry,dx,rx,ci,co)
    w8 = jnp.transpose(w8, (0, 2, 1, 3, 4, 5)).reshape(K16, C_out)  # (dy,dx,ry,rx,ci) -> K16
    wmat = jnp.pad(w8, ((0, 0), (0, CPAD - C_out))).astype(jnp.bfloat16)

    kernel = _build_stem_kernel(OH, OW, PH, PW, K4, CPAD, RB)

    # VMEM budget from actual buffer sizes (x2 headroom), capped for v7x (64 MiB).
    vmem_need = (2 * Hh * Wh * K4 * 2            # input block, bf16, double-buffered
                 + 2 * PH * PW * CPAD * 4        # output block, f32, double-buffered
                 + 2 * K16 * CPAD * 2            # resident weights, bf16
                 + (OH + 2) * PW * CPAD * 4      # acc scratch
                 + RB * OW * CPAD * 4)           # stage scratch
    vmem_limit = int(min(max(2 * vmem_need, 16 * 1024 * 1024), 48 * 1024 * 1024))

    out = pl.pallas_call(
        kernel,
        out_shape=jax.ShapeDtypeStruct((N, PH, PW, CPAD), jnp.float32),
        grid=(N,),
        in_specs=[
            pl.BlockSpec((1, Hh, Wh, K4), lambda n: (n, 0, 0, 0)),
            pl.BlockSpec((K16, CPAD), lambda n: (0, 0)),      # resident weights
        ],
        out_specs=pl.BlockSpec((1, PH, PW, CPAD), lambda n: (n, 0, 0, 0)),
        scratch_shapes=[
            pltpu.VMEM((OH + 2, PW, CPAD), jnp.float32),      # col-pooled conv + halo
            pltpu.VMEM((RB * OW, CPAD), jnp.float32),         # conv row-block staging
        ],
        compiler_params=pltpu.CompilerParams(
            dimension_semantics=("parallel",),
            vmem_limit_bytes=vmem_limit),
    )(x2, wmat)

    out = out[..., :C_out]
    return jnp.transpose(out, (0, 3, 1, 2))                   # back to NCHW


# ------------------------------ reference path ------------------------------

def stem_b_reference(x_nchw, w_oihw):
    y = lax.conv_general_dilated(
        x_nchw.astype(jnp.float32), w_oihw.astype(jnp.float32),
        window_strides=(2, 2), padding=((3, 3), (3, 3)),
        dimension_numbers=("NCHW", "OIHW", "NCHW"))
    return lax.reduce_window(
        y, -jnp.inf, lax.max,
        window_dimensions=(1, 1, 3, 3), window_strides=(1, 1, 2, 2),
        padding=((0, 0), (0, 0), (1, 1), (1, 1)))


# ---------------------------------- main ------------------------------------

if __name__ == "__main__":
    key = jax.random.PRNGKey(0)
    k_x, k_w = jax.random.split(key)

    N, C_in, H, W = 2, 4, 16, 16
    C_out = 8

    x = jax.random.normal(k_x, (N, C_in, H, W), dtype=jnp.float32)
    fan_in = C_in * 7 * 7
    w = jax.random.normal(k_w, (C_out, C_in, 7, 7), dtype=jnp.float32)
    w = w * np.sqrt(2.0 / fan_in)

    out = jax.block_until_ready(stem_b_forward(x, w))
    ref = jax.block_until_ready(stem_b_reference(x, w))

    assert out.shape == (N, C_out, 4, 4), out.shape
    # bf16 matmul operands (f32 accumulation) -> loosened tolerance vs f32 ref.
    np.testing.assert_allclose(np.asarray(out), np.asarray(ref),
                               rtol=3e-2, atol=3e-2)

    print("KERNEL_OK")
</pallas_src>

<mosaic_0001>
module attributes {stable_mosaic.version = 11 : i64} {
  func.func @kernel(%arg0: i32, %arg1: memref<1x11x11x16xbf16, #tpu.memory_space<vmem>>, %arg2: memref<256x128xbf16, #tpu.memory_space<vmem>>, %arg3: memref<1x4x4x128xf32, #tpu.memory_space<vmem>>, %arg4: memref<10x4x128xf32, #tpu.memory_space<vmem>>, %arg5: memref<64x128xf32, #tpu.memory_space<vmem>>) attributes {dimension_semantics = [#tpu.dimension_semantics<parallel>], iteration_bounds = array<i64: 2>, scalar_prefetch = 0 : i64, scratch_operands = 2 : i64, tpu.core_type = #tpu.core_type<tc>, window_params = [{transform_indices = @transform_0, window_bounds = array<i64: 1, 11, 11, 16>}, {pipeline_mode = #tpu.pipeline_mode<synchronous>, transform_indices = @transform_1, window_bounds = array<i64: 256, 128>}, {transform_indices = @transform_2, window_bounds = array<i64: 1, 4, 4, 128>}]} {
    %cst = arith.constant -3.40282347E+38 : f32
    %0 = vector.broadcast %cst : f32 to vector<4x128xf32>
    %cst_0 = arith.constant -3.40282347E+38 : f32
    %1 = vector.broadcast %cst_0 : f32 to vector<1x128xf32>
    %c0 = arith.constant 0 : index
    %c0_1 = arith.constant 0 : index
    %c0_2 = arith.constant 0 : index
    %2 = vector.load %arg4[%c0, %c0_1, %c0_2] : memref<10x4x128xf32, #tpu.memory_space<vmem>>, vector<1x4x128xf32>
    %3 = vector.shape_cast %2 : vector<1x4x128xf32> to vector<4x128xf32>
    %4 = vector.shape_cast %0 : vector<4x128xf32> to vector<1x4x128xf32>
    tpu.vector_store %arg4[%c0, %c0_1, %c0_2], %4 {strides = array<i32>} : memref<10x4x128xf32, #tpu.memory_space<vmem>>, vector<1x4x128xf32>,
    %c9 = arith.constant 9 : index
    %c0_3 = arith.constant 0 : index
    %c0_4 = arith.constant 0 : index
    %5 = vector.load %arg4[%c9, %c0_3, %c0_4] : memref<10x4x128xf32, #tpu.memory_space<vmem>>, vector<1x4x128xf32>
    %6 = vector.shape_cast %5 : vector<1x4x128xf32> to vector<4x128xf32>
    %7 = vector.shape_cast %0 : vector<4x128xf32> to vector<1x4x128xf32>
    tpu.vector_store %arg4[%c9, %c0_3, %c0_4], %7 {strides = array<i32>} : memref<10x4x128xf32, #tpu.memory_space<vmem>>, vector<1x4x128xf32>,
    %c0_i32 = arith.constant 0 : i32
    %c8_i32 = arith.constant 8 : i32
    %8 = arith.muli %c0_i32, %c8_i32 : i32
    %c0_i32_5 = arith.constant 0 : i32
    %9 = arith.addi %8, %c0_i32_5 : i32
    %c0_6 = arith.constant 0 : index
    %10 = arith.index_cast %9 : i32 to index
    %c0_7 = arith.constant 0 : index
    %c0_8 = arith.constant 0 : index
    %11 = vector.load %arg1[%c0_6, %10, %c0_7, %c0_8] : memref<1x11x11x16xbf16, #tpu.memory_space<vmem>>, vector<1x8x8x16xbf16>
    %12 = vector.shape_cast %11 : vector<1x8x8x16xbf16> to vector<8x8x16xbf16>
    %c0_i32_9 = arith.constant 0 : i32
    %13 = arith.addi %8, %c0_i32_9 : i32
    %c0_10 = arith.constant 0 : index
    %14 = arith.index_cast %13 : i32 to index
    %c1 = arith.constant 1 : index
    %c0_11 = arith.constant 0 : index
    %15 = vector.load %arg1[%c0_10, %14, %c1, %c0_11] : memref<1x11x11x16xbf16, #tpu.memory_space<vmem>>, vector<1x8x8x16xbf16>
    %16 = vector.shape_cast %15 : vector<1x8x8x16xbf16> to vector<8x8x16xbf16>
    %c0_i32_12 = arith.constant 0 : i32
    %17 = arith.addi %8, %c0_i32_12 : i32
    %c0_13 = arith.constant 0 : index
    %18 = arith.index_cast %17 : i32 to index
    %c2 = arith.constant 2 : index
    %c0_14 = arith.constant 0 : index
    %19 = vector.load %arg1[%c0_13, %18, %c2, %c0_14] : memref<1x11x11x16xbf16, #tpu.memory_space<vmem>>, vector<1x8x8x16xbf16>
    %20 = vector.shape_cast %19 : vector<1x8x8x16xbf16> to vector<8x8x16xbf16>
    %c0_i32_15 = arith.constant 0 : i32
    %21 = arith.addi %8, %c0_i32_15 : i32
    %c0_16 = arith.constant 0 : index
    %22 = arith.index_cast %21 : i32 to index
    %c3 = arith.constant 3 : index
    %c0_17 = arith.constant 0 : index
    %23 = vector.load %arg1[%c0_16, %22, %c3, %c0_17] : memref<1x11x11x16xbf16, #tpu.memory_space<vmem>>, vector<1x8x8x16xbf16>
    %24 = vector.shape_cast %23 : vector<1x8x8x16xbf16> to vector<8x8x16xbf16>
    %25 = tpu.concatenate %12, %16, %20, %24 in 2 : vector<8x8x16xbf16>, vector<8x8x16xbf16>, vector<8x8x16xbf16>, vector<8x8x16xbf16> -> vector<8x8x64xbf16>
    %c1_i32 = arith.constant 1 : i32
    %26 = arith.addi %8, %c1_i32 : i32
    %c0_18 = arith.constant 0 : index
    %27 = arith.index_cast %26 : i32 to index
    %c0_19 = arith.constant 0 : index
    %c0_20 = arith.constant 0 : index
    %28 = vector.load %arg1[%c0_18, %27, %c0_19, %c0_20] : memref<1x11x11x16xbf16, #tpu.memory_space<vmem>>, vector<1x8x8x16xbf16>
    %29 = vector.shape_cast %28 : vector<1x8x8x16xbf16> to vector<8x8x16xbf16>
    %c1_i32_21 = arith.constant 1 : i32
    %30 = arith.addi %8, %c1_i32_21 : i32
    %c0_22 = arith.constant 0 : index
    %31 = arith.index_cast %30 : i32 to index
    %c1_23 = arith.constant 1 : index
    %c0_24 = arith.constant 0 : index
    %32 = vector.load %arg1[%c0_22, %31, %c1_23, %c0_24] : memref<1x11x11x16xbf16, #tpu.memory_space<vmem>>, vector<1x8x8x16xbf16>
    %33 = vector.shape_cast %32 : vector<1x8x8x16xbf16> to vector<8x8x16xbf16>
    %c1_i32_25 = arith.constant 1 : i32
    %34 = arith.addi %8, %c1_i32_25 : i32
    %c0_26 = arith.constant 0 : index
    %35 = arith.index_cast %34 : i32 to index
    %c2_27 = arith.constant 2 : index
    %c0_28 = arith.constant 0 : index
    %36 = vector.load %arg1[%c0_26, %35, %c2_27, %c0_28] : memref<1x11x11x16xbf16, #tpu.memory_space<vmem>>, vector<1x8x8x16xbf16>
    %37 = vector.shape_cast %36 : vector<1x8x8x16xbf16> to vector<8x8x16xbf16>
    %c1_i32_29 = arith.constant 1 : i32
    %38 = arith.addi %8, %c1_i32_29 : i32
    %c0_30 = arith.constant 0 : index
    %39 = arith.index_cast %38 : i32 to index
    %c3_31 = arith.constant 3 : index
    %c0_32 = arith.constant 0 : index
    %40 = vector.load %arg1[%c0_30, %39, %c3_31, %c0_32] : memref<1x11x11x16xbf16, #tpu.memory_space<vmem>>, vector<1x8x8x16xbf16>
    %41 = vector.shape_cast %40 : vector<1x8x8x16xbf16> to vector<8x8x16xbf16>
    %42 = tpu.concatenate %29, %33, %37, %41 in 2 : vector<8x8x16xbf16>, vector<8x8x16xbf16>, vector<8x8x16xbf16>, vector<8x8x16xbf16> -> vector<8x8x64xbf16>
    %c2_i32 = arith.constant 2 : i32
    %43 = arith.addi %8, %c2_i32 : i32
    %c0_33 = arith.constant 0 : index
    %44 = arith.index_cast %43 : i32 to index
    %c0_34 = arith.constant 0 : index
    %c0_35 = arith.constant 0 : index
    %45 = vector.load %arg1[%c0_33, %44, %c0_34, %c0_35] : memref<1x11x11x16xbf16, #tpu.memory_space<vmem>>, vector<1x8x8x16xbf16>
    %46 = vector.shape_cast %45 : vector<1x8x8x16xbf16> to vector<8x8x16xbf16>
    %c2_i32_36 = arith.constant 2 : i32
    %47 = arith.addi %8, %c2_i32_36 : i32
    %c0_37 = arith.constant 0 : index
    %48 = arith.index_cast %47 : i32 to index
    %c1_38 = arith.constant 1 : index
    %c0_39 = arith.constant 0 : index
    %49 = vector.load %arg1[%c0_37, %48, %c1_38, %c0_39] : memref<1x11x11x16xbf16, #tpu.memory_space<vmem>>, vector<1x8x8x16xbf16>
    %50 = vector.shape_cast %49 : vector<1x8x8x16xbf16> to vector<8x8x16xbf16>
    %c2_i32_40 = arith.constant 2 : i32
    %51 = arith.addi %8, %c2_i32_40 : i32
    %c0_41 = arith.constant 0 : index
    %52 = arith.index_cast %51 : i32 to index
    %c2_42 = arith.constant 2 : index
    %c0_43 = arith.constant 0 : index
    %53 = vector.load %arg1[%c0_41, %52, %c2_42, %c0_43] : memref<1x11x11x16xbf16, #tpu.memory_space<vmem>>, vector<1x8x8x16xbf16>
    %54 = vector.shape_cast %53 : vector<1x8x8x16xbf16> to vector<8x8x16xbf16>
    %c2_i32_44 = arith.constant 2 : i32
    %55 = arith.addi %8, %c2_i32_44 : i32
    %c0_45 = arith.constant 0 : index
    %56 = arith.index_cast %55 : i32 to index
    %c3_46 = arith.constant 3 : index
    %c0_47 = arith.constant 0 : index
    %57 = vector.load %arg1[%c0_45, %56, %c3_46, %c0_47] : memref<1x11x11x16xbf16, #tpu.memory_space<vmem>>, vector<1x8x8x16xbf16>
    %58 = vector.shape_cast %57 : vector<1x8x8x16xbf16> to vector<8x8x16xbf16>
    %59 = tpu.concatenate %46, %50, %54, %58 in 2 : vector<8x8x16xbf16>, vector<8x8x16xbf16>, vector<8x8x16xbf16>, vector<8x8x16xbf16> -> vector<8x8x64xbf16>
    %c3_i32 = arith.constant 3 : i32
    %60 = arith.addi %8, %c3_i32 : i32
    %c0_48 = arith.constant 0 : index
    %61 = arith.index_cast %60 : i32 to index
    %c0_49 = arith.constant 0 : index
    %c0_50 = arith.constant 0 : index
    %62 = vector.load %arg1[%c0_48, %61, %c0_49, %c0_50] : memref<1x11x11x16xbf16, #tpu.memory_space<vmem>>, vector<1x8x8x16xbf16>
    %63 = vector.shape_cast %62 : vector<1x8x8x16xbf16> to vector<8x8x16xbf16>
    %c3_i32_51 = arith.constant 3 : i32
    %64 = arith.addi %8, %c3_i32_51 : i32
    %c0_52 = arith.constant 0 : index
    %65 = arith.index_cast %64 : i32 to index
    %c1_53 = arith.constant 1 : index
    %c0_54 = arith.constant 0 : index
    %66 = vector.load %arg1[%c0_52, %65, %c1_53, %c0_54] : memref<1x11x11x16xbf16, #tpu.memory_space<vmem>>, vector<1x8x8x16xbf16>
    %67 = vector.shape_cast %66 : vector<1x8x8x16xbf16> to vector<8x8x16xbf16>
    %c3_i32_55 = arith.constant 3 : i32
    %68 = arith.addi %8, %c3_i32_55 : i32
    %c0_56 = arith.constant 0 : index
    %69 = arith.index_cast %68 : i32 to index
    %c2_57 = arith.constant 2 : index
    %c0_58 = arith.constant 0 : index
    %70 = vector.load %arg1[%c0_56, %69, %c2_57, %c0_58] : memref<1x11x11x16xbf16, #tpu.memory_space<vmem>>, vector<1x8x8x16xbf16>
    %71 = vector.shape_cast %70 : vector<1x8x8x16xbf16> to vector<8x8x16xbf16>
    %c3_i32_59 = arith.constant 3 : i32
    %72 = arith.addi %8, %c3_i32_59 : i32
    %c0_60 = arith.constant 0 : index
    %73 = arith.index_cast %72 : i32 to index
    %c3_61 = arith.constant 3 : index
    %c0_62 = arith.constant 0 : index
    %74 = vector.load %arg1[%c0_60, %73, %c3_61, %c0_62] : memref<1x11x11x16xbf16, #tpu.memory_space<vmem>>, vector<1x8x8x16xbf16>
    %75 = vector.shape_cast %74 : vector<1x8x8x16xbf16> to vector<8x8x16xbf16>
    %76 = tpu.concatenate %63, %67, %71, %75 in 2 : vector<8x8x16xbf16>, vector<8x8x16xbf16>, vector<8x8x16xbf16>, vector<8x8x16xbf16> -> vector<8x8x64xbf16>
    %77 = tpu.concatenate %25, %42, %59, %76 in 2 : vector<8x8x64xbf16>, vector<8x8x64xbf16>, vector<8x8x64xbf16>, vector<8x8x64xbf16> -> vector<8x8x256xbf16>
    %78 = vector.shape_cast %77 : vector<8x8x256xbf16> to vector<64x256xbf16>
    %c0_63 = arith.constant 0 : index
    %c0_64 = arith.constant 0 : index
    %79 = vector.load %arg2[%c0_63, %c0_64] : memref<256x128xbf16, #tpu.memory_space<vmem>>, vector<256x128xbf16>
    %cst_65 = arith.constant dense<0.000000e+00> : vector<64x128xf32>
    %80 = tpu.matmul %78, %79, %cst_65 {dimension_numbers = #tpu.dot_dimension_numbers<[1], [0], [0], [1], [0, 0, 1, 1], [], []>} : vector<64x256xbf16>, vector<256x128xbf16>, vector<64x128xf32> -> vector<64x128xf32>
    %c0_66 = arith.constant 0 : index
    %c0_67 = arith.constant 0 : index
    %81 = vector.load %arg5[%c0_66, %c0_67] : memref<64x128xf32, #tpu.memory_space<vmem>>, vector<64x128xf32>
    tpu.vector_store %arg5[%c0_66, %c0_67], %80 {strides = array<i32>} : memref<64x128xf32, #tpu.memory_space<vmem>>, vector<64x128xf32>,
    %c0_68 = arith.constant 0 : index
    %c0_69 = arith.constant 0 : index
    %82 = tpu.strided_load %arg5[%c0_68, %c0_69] {strides = array<i32: 2, 1>} : memref<64x128xf32, #tpu.memory_space<vmem>>, vector<4x128xf32>
    %c1_70 = arith.constant 1 : index
    %c0_71 = arith.constant 0 : index
    %83 = tpu.strided_load %arg5[%c1_70, %c0_71] {strides = array<i32: 2, 1>} : memref<64x128xf32, #tpu.memory_space<vmem>>, vector<4x128xf32>
    %84 = tpu.concatenate %1, %83 in 0 : vector<1x128xf32>, vector<4x128xf32> -> vector<5x128xf32>
    %85 = vector.extract_strided_slice %84 {offsets = [0, 0], sizes = [4, 128], strides = [1, 1]} : vector<5x128xf32> to vector<4x128xf32>
    %86 = arith.maximumf %82, %83 : vector<4x128xf32>
    %87 = arith.maximumf %86, %85 : vector<4x128xf32>
    %c1_i32_72 = arith.constant 1 : i32
    %88 = arith.addi %8, %c1_i32_72 : i32
    %c0_i32_73 = arith.constant 0 : i32
    %89 = arith.addi %88, %c0_i32_73 : i32
    %90 = arith.index_cast %89 : i32 to index
    %c0_74 = arith.constant 0 : index
    %c0_75 = arith.constant 0 : index
    %91 = vector.load %arg4[%90, %c0_74, %c0_75] : memref<10x4x128xf32, #tpu.memory_space<vmem>>, vector<1x4x128xf32>
    %92 = vector.shape_cast %91 : vector<1x4x128xf32> to vector<4x128xf32>
    %93 = vector.shape_cast %87 : vector<4x128xf32> to vector<1x4x128xf32>
    tpu.vector_store %arg4[%90, %c0_74, %c0_75], %93 {strides = array<i32>} : memref<10x4x128xf32, #tpu.memory_space<vmem>>, vector<1x4x128xf32>,
    %c8 = arith.constant 8 : index
    %c0_76 = arith.constant 0 : index
    %94 = tpu.strided_load %arg5[%c8, %c0_76] {strides = array<i32: 2, 1>} : memref<64x128xf32, #tpu.memory_space<vmem>>, vector<4x128xf32>
    %c9_77 = arith.constant 9 : index
    %c0_78 = arith.constant 0 : index
    %95 = tpu.strided_load %arg5[%c9_77, %c0_78] {strides = array<i32: 2, 1>} : memref<64x128xf32, #tpu.memory_space<vmem>>, vector<4x128xf32>
    %96 = tpu.concatenate %1, %95 in 0 : vector<1x128xf32>, vector<4x128xf32> -> vector<5x128xf32>
    %97 = vector.extract_strided_slice %96 {offsets = [0, 0], sizes = [4, 128], strides = [1, 1]} : vector<5x128xf32> to vector<4x128xf32>
    %98 = arith.maximumf %94, %95 : vector<4x128xf32>
    %99 = arith.maximumf %98, %97 : vector<4x128xf32>
    %c1_i32_79 = arith.constant 1 : i32
    %100 = arith.addi %8, %c1_i32_79 : i32
    %c1_i32_80 = arith.constant 1 : i32
    %101 = arith.addi %100, %c1_i32_80 : i32
    %102 = arith.index_cast %101 : i32 to index
    %c0_81 = arith.constant 0 : index
    %c0_82 = arith.constant 0 : index
    %103 = vector.load %arg4[%102, %c0_81, %c0_82] : memref<10x4x128xf32, #tpu.memory_space<vmem>>, vector<1x4x128xf32>
    %104 = vector.shape_cast %103 : vector<1x4x128xf32> to vector<4x128xf32>
    %105 = vector.shape_cast %99 : vector<4x128xf32> to vector<1x4x128xf32>
    tpu.vector_store %arg4[%102, %c0_81, %c0_82], %105 {strides = array<i32>} : memref<10x4x128xf32, #tpu.memory_space<vmem>>, vector<1x4x128xf32>,
    %c16 = arith.constant 16 : index
    %c0_83 = arith.constant 0 : index
    %106 = tpu.strided_load %arg5[%c16, %c0_83] {strides = array<i32: 2, 1>} : memref<64x128xf32, #tpu.memory_space<vmem>>, vector<4x128xf32>
    %c17 = arith.constant 17 : index
    %c0_84 = arith.constant 0 : index
    %107 = tpu.strided_load %arg5[%c17, %c0_84] {strides = array<i32: 2, 1>} : memref<64x128xf32, #tpu.memory_space<vmem>>, vector<4x128xf32>
    %108 = tpu.concatenate %1, %107 in 0 : vector<1x128xf32>, vector<4x128xf32> -> vector<5x128xf32>
    %109 = vector.extract_strided_slice %108 {offsets = [0, 0], sizes = [4, 128], strides = [1, 1]} : vector<5x128xf32> to vector<4x128xf32>
    %110 = arith.maximumf %106, %107 : vector<4x128xf32>
    %111 = arith.maximumf %110, %109 : vector<4x128xf32>
    %c1_i32_85 = arith.constant 1 : i32
    %112 = arith.addi %8, %c1_i32_85 : i32
    %c2_i32_86 = arith.constant 2 : i32
    %113 = arith.addi %112, %c2_i32_86 : i32
    %114 = arith.index_cast %113 : i32 to index
    %c0_87 = arith.constant 0 : index
    %c0_88 = arith.constant 0 : index
    %115 = vector.load %arg4[%114, %c0_87, %c0_88] : memref<10x4x128xf32, #tpu.memory_space<vmem>>, vector<1x4x128xf32>
    %116 = vector.shape_cast %115 : vector<1x4x128xf32> to vector<4x128xf32>
    %117 = vector.shape_cast %111 : vector<4x128xf32> to vector<1x4x128xf32>
    tpu.vector_store %arg4[%114, %c0_87, %c0_88], %117 {strides = array<i32>} : memref<10x4x128xf32, #tpu.memory_space<vmem>>, vector<1x4x128xf32>,
    %c24 = arith.constant 24 : index
    %c0_89 = arith.constant 0 : index
    %118 = tpu.strided_load %arg5[%c24, %c0_89] {strides = array<i32: 2, 1>} : memref<64x128xf32, #tpu.memory_space<vmem>>, vector<4x128xf32>
    %c25 = arith.constant 25 : index
    %c0_90 = arith.constant 0 : index
    %119 = tpu.strided_load %arg5[%c25, %c0_90] {strides = array<i32: 2, 1>} : memref<64x128xf32, #tpu.memory_space<vmem>>, vector<4x128xf32>
    %120 = tpu.concatenate %1, %119 in 0 : vector<1x128xf32>, vector<4x128xf32> -> vector<5x128xf32>
    %121 = vector.extract_strided_slice %120 {offsets = [0, 0], sizes = [4, 128], strides = [1, 1]} : vector<5x128xf32> to vector<4x128xf32>
    %122 = arith.maximumf %118, %119 : vector<4x128xf32>
    %123 = arith.maximumf %122, %121 : vector<4x128xf32>
    %c1_i32_91 = arith.constant 1 : i32
    %124 = arith.addi %8, %c1_i32_91 : i32
    %c3_i32_92 = arith.constant 3 : i32
    %125 = arith.addi %124, %c3_i32_92 : i32
    %126 = arith.index_cast %125 : i32 to index
    %c0_93 = arith.constant 0 : index
    %c0_94 = arith.constant 0 : index
    %127 = vector.load %arg4[%126, %c0_93, %c0_94] : memref<10x4x128xf32, #tpu.memory_space<vmem>>, vector<1x4x128xf32>
    %128 = vector.shape_cast %127 : vector<1x4x128xf32> to vector<4x128xf32>
    %129 = vector.shape_cast %123 : vector<4x128xf32> to vector<1x4x128xf32>
    tpu.vector_store %arg4[%126, %c0_93, %c0_94], %129 {strides = array<i32>} : memref<10x4x128xf32, #tpu.memory_space<vmem>>, vector<1x4x128xf32>,
    %c32 = arith.constant 32 : index
    %c0_95 = arith.constant 0 : index
    %130 = tpu.strided_load %arg5[%c32, %c0_95] {strides = array<i32: 2, 1>} : memref<64x128xf32, #tpu.memory_space<vmem>>, vector<4x128xf32>
    %c33 = arith.constant 33 : index
    %c0_96 = arith.constant 0 : index
    %131 = tpu.strided_load %arg5[%c33, %c0_96] {strides = array<i32: 2, 1>} : memref<64x128xf32, #tpu.memory_space<vmem>>, vector<4x128xf32>
    %132 = tpu.concatenate %1, %131 in 0 : vector<1x128xf32>, vector<4x128xf32> -> vector<5x128xf32>
    %133 = vector.extract_strided_slice %132 {offsets = [0, 0], sizes = [4, 128], strides = [1, 1]} : vector<5x128xf32> to vector<4x128xf32>
    %134 = arith.maximumf %130, %131 : vector<4x128xf32>
    %135 = arith.maximumf %134, %133 : vector<4x128xf32>
    %c1_i32_97 = arith.constant 1 : i32
    %136 = arith.addi %8, %c1_i32_97 : i32
    %c4_i32 = arith.constant 4 : i32
    %137 = arith.addi %136, %c4_i32 : i32
    %138 = arith.index_cast %137 : i32 to index
    %c0_98 = arith.constant 0 : index
    %c0_99 = arith.constant 0 : index
    %139 = vector.load %arg4[%138, %c0_98, %c0_99] : memref<10x4x128xf32, #tpu.memory_space<vmem>>, vector<1x4x128xf32>
    %140 = vector.shape_cast %139 : vector<1x4x128xf32> to vector<4x128xf32>
    %141 = vector.shape_cast %135 : vector<4x128xf32> to vector<1x4x128xf32>
    tpu.vector_store %arg4[%138, %c0_98, %c0_99], %141 {strides = array<i32>} : memref<10x4x128xf32, #tpu.memory_space<vmem>>, vector<1x4x128xf32>,
    %c40 = arith.constant 40 : index
    %c0_100 = arith.constant 0 : index
    %142 = tpu.strided_load %arg5[%c40, %c0_100] {strides = array<i32: 2, 1>} : memref<64x128xf32, #tpu.memory_space<vmem>>, vector<4x128xf32>
    %c41 = arith.constant 41 : index
    %c0_101 = arith.constant 0 : index
    %143 = tpu.strided_load %arg5[%c41, %c0_101] {strides = array<i32: 2, 1>} : memref<64x128xf32, #tpu.memory_space<vmem>>, vector<4x128xf32>
    %144 = tpu.concatenate %1, %143 in 0 : vector<1x128xf32>, vector<4x128xf32> -> vector<5x128xf32>
    %145 = vector.extract_strided_slice %144 {offsets = [0, 0], sizes = [4, 128], strides = [1, 1]} : vector<5x128xf32> to vector<4x128xf32>
    %146 = arith.maximumf %142, %143 : vector<4x128xf32>
    %147 = arith.maximumf %146, %145 : vector<4x128xf32>
    %c1_i32_102 = arith.constant 1 : i32
    %148 = arith.addi %8, %c1_i32_102 : i32
    %c5_i32 = arith.constant 5 : i32
    %149 = arith.addi %148, %c5_i32 : i32
    %150 = arith.index_cast %149 : i32 to index
    %c0_103 = arith.constant 0 : index
    %c0_104 = arith.constant 0 : index
    %151 = vector.load %arg4[%150, %c0_103, %c0_104] : memref<10x4x128xf32, #tpu.memory_space<vmem>>, vector<1x4x128xf32>
    %152 = vector.shape_cast %151 : vector<1x4x128xf32> to vector<4x128xf32>
    %153 = vector.shape_cast %147 : vector<4x128xf32> to vector<1x4x128xf32>
    tpu.vector_store %arg4[%150, %c0_103, %c0_104], %153 {strides = array<i32>} : memref<10x4x128xf32, #tpu.memory_space<vmem>>, vector<1x4x128xf32>,
    %c48 = arith.constant 48 : index
    %c0_105 = arith.constant 0 : index
    %154 = tpu.strided_load %arg5[%c48, %c0_105] {strides = array<i32: 2, 1>} : memref<64x128xf32, #tpu.memory_space<vmem>>, vector<4x128xf32>
    %c49 = arith.constant 49 : index
    %c0_106 = arith.constant 0 : index
    %155 = tpu.strided_load %arg5[%c49, %c0_106] {strides = array<i32: 2, 1>} : memref<64x128xf32, #tpu.memory_space<vmem>>, vector<4x128xf32>
    %156 = tpu.concatenate %1, %155 in 0 : vector<1x128xf32>, vector<4x128xf32> -> vector<5x128xf32>
    %157 = vector.extract_strided_slice %156 {offsets = [0, 0], sizes = [4, 128], strides = [1, 1]} : vector<5x128xf32> to vector<4x128xf32>
    %158 = arith.maximumf %154, %155 : vector<4x128xf32>
    %159 = arith.maximumf %158, %157 : vector<4x128xf32>
    %c1_i32_107 = arith.constant 1 : i32
    %160 = arith.addi %8, %c1_i32_107 : i32
    %c6_i32 = arith.constant 6 : i32
    %161 = arith.addi %160, %c6_i32 : i32
    %162 = arith.index_cast %161 : i32 to index
    %c0_108 = arith.constant 0 : index
    %c0_109 = arith.constant 0 : index
    %163 = vector.load %arg4[%162, %c0_108, %c0_109] : memref<10x4x128xf32, #tpu.memory_space<vmem>>, vector<1x4x128xf32>
    %164 = vector.shape_cast %163 : vector<1x4x128xf32> to vector<4x128xf32>
    %165 = vector.shape_cast %159 : vector<4x128xf32> to vector<1x4x128xf32>
    tpu.vector_store %arg4[%162, %c0_108, %c0_109], %165 {strides = array<i32>} : memref<10x4x128xf32, #tpu.memory_space<vmem>>, vector<1x4x128xf32>,
    %c56 = arith.constant 56 : index
    %c0_110 = arith.constant 0 : index
    %166 = tpu.strided_load %arg5[%c56, %c0_110] {strides = array<i32: 2, 1>} : memref<64x128xf32, #tpu.memory_space<vmem>>, vector<4x128xf32>
    %c57 = arith.constant 57 : index
    %c0_111 = arith.constant 0 : index
    %167 = tpu.strided_load %arg5[%c57, %c0_111] {strides = array<i32: 2, 1>} : memref<64x128xf32, #tpu.memory_space<vmem>>, vector<4x128xf32>
    %168 = tpu.concatenate %1, %167 in 0 : vector<1x128xf32>, vector<4x128xf32> -> vector<5x128xf32>
    %169 = vector.extract_strided_slice %168 {offsets = [0, 0], sizes = [4, 128], strides = [1, 1]} : vector<5x128xf32> to vector<4x128xf32>
    %170 = arith.maximumf %166, %167 : vector<4x128xf32>
    %171 = arith.maximumf %170, %169 : vector<4x128xf32>
    %c1_i32_112 = arith.constant 1 : i32
    %172 = arith.addi %8, %c1_i32_112 : i32
    %c7_i32 = arith.constant 7 : i32
    %173 = arith.addi %172, %c7_i32 : i32
    %174 = arith.index_cast %173 : i32 to index
    %c0_113 = arith.constant 0 : index
    %c0_114 = arith.constant 0 : index
    %175 = vector.load %arg4[%174, %c0_113, %c0_114] : memref<10x4x128xf32, #tpu.memory_space<vmem>>, vector<1x4x128xf32>
    %176 = vector.shape_cast %175 : vector<1x4x128xf32> to vector<4x128xf32>
    %177 = vector.shape_cast %171 : vector<4x128xf32> to vector<1x4x128xf32>
    tpu.vector_store %arg4[%174, %c0_113, %c0_114], %177 {strides = array<i32>} : memref<10x4x128xf32, #tpu.memory_space<vmem>>, vector<1x4x128xf32>,
    %c1_i32_115 = arith.constant 1 : i32
    %c0_i32_116 = arith.constant 0 : i32
    %c4_i32_117 = arith.constant 4 : i32
    %178 = arith.addi %c0_i32_116, %c4_i32_117 : i32
    %c1_i32_118 = arith.constant 1 : i32
    scf.for %arg6 = %c0_i32_116 to %178 step %c1_i32_118  : i32 {
      %c2_i32_120 = arith.constant 2 : i32
      %179 = arith.muli %c2_i32_120, %arg6 : i32
      %180 = arith.index_cast %179 : i32 to index
      %c0_121 = arith.constant 0 : index
      %c0_122 = arith.constant 0 : index
      %181 = vector.load %arg4[%180, %c0_121, %c0_122] : memref<10x4x128xf32, #tpu.memory_space<vmem>>, vector<1x4x128xf32>
      %182 = vector.shape_cast %181 : vector<1x4x128xf32> to vector<4x128xf32>
      %c2_i32_123 = arith.constant 2 : i32
      %183 = arith.muli %c2_i32_123, %arg6 : i32
      %c1_i32_124 = arith.constant 1 : i32
      %184 = arith.addi %183, %c1_i32_124 : i32
      %185 = arith.index_cast %184 : i32 to index
      %c0_125 = arith.constant 0 : index
      %c0_126 = arith.constant 0 : index
      %186 = vector.load %arg4[%185, %c0_125, %c0_126] : memref<10x4x128xf32, #tpu.memory_space<vmem>>, vector<1x4x128xf32>
      %187 = vector.shape_cast %186 : vector<1x4x128xf32> to vector<4x128xf32>
      %188 = arith.maximumf %182, %187 : vector<4x128xf32>
      %c2_i32_127 = arith.constant 2 : i32
      %189 = arith.muli %c2_i32_127, %arg6 : i32
      %c2_i32_128 = arith.constant 2 : i32
      %190 = arith.addi %189, %c2_i32_128 : i32
      %191 = arith.index_cast %190 : i32 to index
      %c0_129 = arith.constant 0 : index
      %c0_130 = arith.constant 0 : index
      %192 = vector.load %arg4[%191, %c0_129, %c0_130] : memref<10x4x128xf32, #tpu.memory_space<vmem>>, vector<1x4x128xf32>
      %193 = vector.shape_cast %192 : vector<1x4x128xf32> to vector<4x128xf32>
      %194 = arith.maximumf %188, %193 : vector<4x128xf32>
      %c0_131 = arith.constant 0 : index
      %195 = arith.index_cast %arg6 : i32 to index
      %c0_132 = arith.constant 0 : index
      %c0_133 = arith.constant 0 : index
      %196 = vector.load %arg3[%c0_131, %195, %c0_132, %c0_133] : memref<1x4x4x128xf32, #tpu.memory_space<vmem>>, vector<1x1x4x128xf32>
      %197 = vector.shape_cast %196 : vector<1x1x4x128xf32> to vector<4x128xf32>
      %198 = vector.shape_cast %194 : vector<4x128xf32> to vector<1x1x4x128xf32>
      tpu.vector_store %arg3[%c0_131, %195, %c0_132, %c0_133], %198 {strides = array<i32>} : memref<1x4x4x128xf32, #tpu.memory_space<vmem>>, vector<1x1x4x128xf32>,
    }
    %c4_i32_119 = arith.constant 4 : i32
    return
  }
  func.func @transform_0(%arg0: i32) -> (i32, i32, i32, i32) {
    %c0_i32 = arith.constant 0 : i32
    %c0_i32_0 = arith.constant 0 : i32
    %c0_i32_1 = arith.constant 0 : i32
    %c0_i32_2 = arith.constant 0 : i32
    return %arg0, %c0_i32, %c0_i32_0, %c0_i32_1 : i32, i32, i32, i32
  }
  func.func @transform_1(%arg0: i32) -> (i32, i32) {
    %c0_i32 = arith.constant 0 : i32
    %c0_i32_0 = arith.constant 0 : i32
    %c0_i32_1 = arith.constant 0 : i32
    return %c0_i32, %c0_i32_0 : i32, i32
  }
  func.func @transform_2(%arg0: i32) -> (i32, i32, i32, i32) {
    %c0_i32 = arith.constant 0 : i32
    %c0_i32_0 = arith.constant 0 : i32
    %c0_i32_1 = arith.constant 0 : i32
    %c0_i32_2 = arith.constant 0 : i32
    return %arg0, %c0_i32, %c0_i32_0, %c0_i32_1 : i32, i32, i32, i32
  }
}

</mosaic_0001>

<llo_original>
// kernel: stem_b_forward.1
$region0: #{stem_b_forward.1}
  #allocation0 [shape = 'u32[]', space=smem, size = 0x4, offset = 0x4, fixed_abs, tag = 'smem constant byte address 0x4 - core index']
  #allocation1 [shape = 'u32[72,128]{1,0:T(1,128)}', space=vmem, size = 0x9000, scoped, tag = 'internal scratch']
  #allocation2 [shape = 'f32[10,4,128]{2,1,0:T(4,128)}', space=vmem, size = 0x5000, scoped, tag = 'scratch operand']
  #allocation3 [shape = 'f32[64,128]{1,0:T(8,128)}', space=vmem, size = 0x8000, scoped, tag = 'scratch operand']
  %s0 = inlined_call_operand.vmem [shape: bf16[2,11,11,16], index: 0, kind: input, shape index: {}]
  %s1 = inlined_call_operand.vmem [shape: bf16[256,128], index: 1, kind: input, shape index: {}]
  %s2 = inlined_call_operand.vmem [shape: f32[2,4,4,128], index: 2, kind: output, shape index: {}]
  %s3 = sld [smem:[#allocation0]]
  $region48: #{stem_b_forward.1} parent=0
    _
  %s5 = ssub.s32 1, %s3
  %s6 = scalar_select 0, %s5, %s3
  loop: start=0, step=1, limit=4
  $region2: #{stem_b_forward.1} parent=0 // loop_pre_header
    _
  $region3: #{stem_b_forward.1} parent=0 // loop_header
    %s8 = sphi 0, %s12
    %p9 = scmp.ge.s32.totalorder %s8, 4
    %s18 = sphi 0, %s20
    %s21 = sphi 0, %s18
    %s22 = sphi 0, %s21
    %s38 = sphi 0, %s22
    %s42 = sphi 0, %s42
    %s44 = sphi 0, %s42
    %s45 = sphi 0, %s44
    %s59 = sphi 0, %s45
    %s65 = sphi 0, %s67
    %s68 = sphi 0, %s65
    %s69 = sphi 0, %s68
    %s85 = sphi 0, %s69
  $region4: #{stem_b_forward.1} parent=0 // loop_header_branch
    %11 = sbr.rel (%p9) target = $region8
  $region5: #{stem_b_forward.1} parent=0 // loop_body
    %s13 = ssub.s32 %s8, 1
    %s14 = ssub.s32 %s8, 2
    %s15 = sadd.s32 %s8, 1
    %s16 = ssub.s32 %s8, %s15
    %p17 = scmp.eq.s32.totalorder %s16, 0
    %s19 = sadd.s32 %s18, 1
    %s20 = scalar_select %p17, %s18, %s19
    %p23 = pneg %p17
    %p24 = scmp.eq.s32.totalorder %s8, 1
    %p25 = por %p23, %p24
    %p26 = scmp.ne.s32.totalorder %s18, %s21
    %p27 = scmp.eq.s32.totalorder %s8, 0
    %p28 = por %p26, %p27
    %p29 = scmp.ne.s32.totalorder %s18, %s21
    %p30 = scmp.eq.s32.totalorder %s13, 1
    %p31 = por %p29, %p30
    %p32 = scmp.ne.s32.totalorder %s21, %s22
    %p33 = scmp.eq.s32.totalorder %s13, 0
    %p34 = por %p32, %p33
    %p35 = scmp.ne.s32.totalorder %s21, %s22
    %p36 = scmp.eq.s32.totalorder %s14, 1
    %p37 = por %p35, %p36
    %p39 = scmp.ne.s32.totalorder %s22, %s38
    %p40 = scmp.eq.s32.totalorder %s14, 0
    %p41 = por %p39, %p40
    %s43 = sadd.s32 %s42, 1
    %p46 = scmp.eq.s32.totalorder %s8, 1
    %p47 = scmp.ne.s32.totalorder %s42, %s44
    %p48 = scmp.eq.s32.totalorder %s8, 0
    %p49 = por %p47, %p48
    %p50 = scmp.ne.s32.totalorder %s42, %s44
    %p51 = scmp.eq.s32.totalorder %s13, 1
    %p52 = por %p50, %p51
    %p53 = scmp.ne.s32.totalorder %s44, %s45
    %p54 = scmp.eq.s32.totalorder %s13, 0
    %p55 = por %p53, %p54
    %p56 = scmp.ne.s32.totalorder %s44, %s45
    %p57 = scmp.eq.s32.totalorder %s14, 1
    %p58 = por %p56, %p57
    %p60 = scmp.ne.s32.totalorder %s45, %s59
    %p61 = scmp.eq.s32.totalorder %s14, 0
    %p62 = por %p60, %p61
    %s63 = ssub.s32 %s8, %s15
    %p64 = scmp.eq.s32.totalorder %s63, 0
    %s66 = sadd.s32 %s65, 1
    %s67 = scalar_select %p64, %s65, %s66
    %p70 = pneg %p64
    %p71 = scmp.eq.s32.totalorder %s8, 1
    %p72 = por %p70, %p71
    %p73 = scmp.ne.s32.totalorder %s65, %s68
    %p74 = scmp.eq.s32.totalorder %s8, 0
    %p75 = por %p73, %p74
    %p76 = scmp.ne.s32.totalorder %s65, %s68
    %p77 = scmp.eq.s32.totalorder %s13, 1
    %p78 = por %p76, %p77
    %p79 = scmp.ne.s32.totalorder %s68, %s69
    %p80 = scmp.eq.s32.totalorder %s13, 0
    %p81 = por %p79, %p80
    %p82 = scmp.ne.s32.totalorder %s68, %s69
    %p83 = scmp.eq.s32.totalorder %s14, 1
    %p84 = por %p82, %p83
    %p86 = scmp.ne.s32.totalorder %s69, %s85
    %p87 = scmp.eq.s32.totalorder %s14, 0
    %p88 = por %p86, %p87
    %p89 = scmp.le.s32.totalorder 1, %s8
    %p90 = scmp.lt.s32.totalorder %s8, 3
    %p91 = pnand %p89, %p90
    %p92 = pneg %p91
    // Predicated region
    $region9: #{stem_b_forward.1} parent=5 // pred_check
      _
    $region10: #{stem_b_forward.1} parent=5 // pred_check_branch
      %94 = sbr.rel (%p91) target = $region12
    $region11: #{stem_b_forward.1} parent=5 // pred_region
      %s95 = ssub.s32 %s8, 1
      // Predicated region
      $region13: #{stem_b_forward.1} parent=11 // pred_check
        %p96 = pneg %p55
      $region14: #{stem_b_forward.1} parent=11 // pred_check_branch
        %98 = sbr.rel (%p96) target = $region16
      $region15: #{stem_b_forward.1} parent=11 // pred_region
        _
      $region16: #{stem_b_forward.1} parent=11 // pred_fallthru
        _
    $region12: #{stem_b_forward.1} parent=5 // pred_fallthru
      _
    %p99 = scmp.lt.s32.totalorder %s8, 2
    // Predicated region
    $region17: #{stem_b_forward.1} parent=5 // pred_check
      %p100 = pneg %p99
    $region18: #{stem_b_forward.1} parent=5 // pred_check_branch
      %102 = sbr.rel (%p100) target = $region20
    $region19: #{stem_b_forward.1} parent=5 // pred_region
      // Predicated region
      $region21: #{stem_b_forward.1} parent=19 // pred_check
        %p103 = pneg %p28
      $region22: #{stem_b_forward.1} parent=19 // pred_check_branch
        %105 = sbr.rel (%p103) target = $region24
      $region23: #{stem_b_forward.1} parent=19 // pred_region
        %p106 = scmp.lt.s32.totalorder %s8, 1
        %s107 = scalar_select %p106, %s8, 1
        %s108 = smul.addr %s107, 22
        %s109 = smul.addr %s108, 4
        %s110 = scalar_lea.vmem %s0, %s109
      $region24: #{stem_b_forward.1} parent=19 // pred_fallthru
        _
    $region20: #{stem_b_forward.1} parent=5 // pred_fallthru
      _
    %p111 = scmp.le.s32.totalorder 1, %s8
    %p112 = scmp.lt.s32.totalorder %s8, 3
    %p113 = pnand %p111, %p112
    %p114 = pneg %p113
    // Predicated region
    $region25: #{stem_b_forward.1} parent=5 // pred_check
      _
    $region26: #{stem_b_forward.1} parent=5 // pred_check_branch
      %116 = sbr.rel (%p113) target = $region28
    $region27: #{stem_b_forward.1} parent=5 // pred_region
      %s117 = ssub.s32 %s8, 1
      %p118 = scmp.lt.s32.totalorder %s13, 1
      %s119 = scalar_select %p118, %s13, 1
      %s120 = smul.addr %s119, 22
      %s121 = smul.addr %s120, 4
      %s122 = scalar_lea.vmem %s0, %s121
      %p123 = pneg %p34
      %p124 = pneg %p31
      %p125 = pneg %p55
      %p126 = pneg %p52
      %p127 = pneg %p81
      %p128 = pneg %p78
      %p129 = scmp.lt.s32.totalorder %s13, 1
      %s130 = scalar_select %p129, %s13, 1
      %s131 = smul.addr %s130, 4
      %s132 = smul.addr %s131, 4
      %s133 = scalar_lea.vmem %s2, %s132
      %p134 = scmp.lt.s32.totalorder %s13, 1
      %s135 = scalar_select %p134, %s13, 1
      %s136 = smul.addr %s135, 22
      %s137 = smul.addr %s136, 4
      %s138 = scalar_lea.vmem %s0, %s137
      %p139 = scmp.lt.s32.totalorder %s13, 1
      %s140 = scalar_select %p139, %s13, 1
      %s141 = smul.addr %s140, 4
      %s142 = smul.addr %s141, 4
      %s143 = scalar_lea.vmem %s2, %s142
      %144 = vst [vmem:[#allocation2] sm:$0xf] -3.4028235e+38
      %s145 = scalar_lea.vmem [#allocation2], 36
      %146 = vst [vmem:[%s145] sm:$0xf] -3.4028235e+38
      %v147 = vld [vmem:[%s138] sm:$0xf]
      %v148 = vld [vmem:[%s138 + $0x8] sm:$0xf]
      %v149 = vld [vmem:[%s138 + $0x10] sm:$0xf]
      %v150 = vld [vmem:[%s138 + $0x18] sm:$0xf]
      %v151 = vld [vmem:[%s138 + $0x20] sm:$0xf]
      %v152 = vld [vmem:[%s138 + $0x28] sm:$0xf]
      %v153 = vld [vmem:[%s138 + $0x30] sm:$0xf]
      %v154 = vld [vmem:[%s138 + $0x38] sm:$0xf]
      %v155 = vld [vmem:[%s138 + $0x4] sm:$0x1]
      %v156 = vld [vmem:[%s138 + $0xc] sm:$0x1]
      %v157 = vld [vmem:[%s138 + $0x14] sm:$0x1]
      %v158 = vld [vmem:[%s138 + $0x1c] sm:$0x1]
      %v159 = vld [vmem:[%s138 + $0x24] sm:$0x1]
      %v160 = vld [vmem:[%s138 + $0x2c] sm:$0x1]
      %v161 = vld [vmem:[%s138 + $0x34] sm:$0x1]
      %v162 = vld [vmem:[%s138 + $0x3c] sm:$0x1]
      %v163 = vld [vmem:[%s138] sm:$0xe]
      %v164 = vld [vmem:[%s138 + $0x8] sm:$0xe]
      %v165 = vld [vmem:[%s138 + $0x10] sm:$0xe]
      %v166 = vld [vmem:[%s138 + $0x18] sm:$0xe]
      %v167 = vld [vmem:[%s138 + $0x20] sm:$0xe]
      %v168 = vld [vmem:[%s138 + $0x28] sm:$0xe]
      %v169 = vld [vmem:[%s138 + $0x30] sm:$0xe]
      %v170 = vld [vmem:[%s138 + $0x38] sm:$0xe]
      %v171 = vld [vmem:[%s138 + $0x4] sm:$0x3]
      %v172 = vld [vmem:[%s138 + $0xc] sm:$0x3]
      %v173 = vld [vmem:[%s138 + $0x14] sm:$0x3]
      %v174 = vld [vmem:[%s138 + $0x1c] sm:$0x3]
      %v175 = vld [vmem:[%s138 + $0x24] sm:$0x3]
      %v176 = vld [vmem:[%s138 + $0x2c] sm:$0x3]
      %v177 = vld [vmem:[%s138 + $0x34] sm:$0x3]
      %v178 = vld [vmem:[%s138 + $0x3c] sm:$0x3]
      %v195 = vunpack.c.l.b16 %v147
      %v196 = vunpack.c.l.b16 %v155
      %v197 = vunpack.c.l.b16 %v148
      %v198 = vunpack.c.l.b16 %v156
      %v199 = vunpack.c.l.b16 %v149
      %v200 = vunpack.c.l.b16 %v157
      %v201 = vunpack.c.l.b16 %v150
      %v202 = vunpack.c.l.b16 %v158
      %v203 = vunpack.c.l.b16 %v151
      %v204 = vunpack.c.l.b16 %v159
      %v205 = vunpack.c.l.b16 %v152
      %v206 = vunpack.c.l.b16 %v160
      %v207 = vunpack.c.l.b16 %v153
      %v208 = vunpack.c.l.b16 %v161
      %v209 = vunpack.c.l.b16 %v154
      %v210 = vunpack.c.l.b16 %v162
      %v211 = vpack.c.b16 %v196, %v195
      %v212 = vpack.c.b16 %v198, %v197
      %v213 = vpack.c.b16 %v200, %v199
      %v214 = vpack.c.b16 %v202, %v201
      %v215 = vpack.c.b16 %v204, %v203
      %v216 = vpack.c.b16 %v206, %v205
      %v217 = vpack.c.b16 %v208, %v207
      %v218 = vpack.c.b16 %v210, %v209
      %v220 = vshrl.u32 %v211, 16
      %v222 = vshll.u32 %v211, 16
      %v224 = vrot.slane %v222, 1
      %v225 = vor.u32 %v220, %v224
      %v227 = vshrl.u32 %v212, 16
      %v229 = vshll.u32 %v212, 16
      %v231 = vrot.slane %v229, 1
      %v232 = vor.u32 %v227, %v231
      %v234 = vshrl.u32 %v213, 16
      %v236 = vshll.u32 %v213, 16
      %v238 = vrot.slane %v236, 1
      %v239 = vor.u32 %v234, %v238
      %v241 = vshrl.u32 %v214, 16
      %v243 = vshll.u32 %v214, 16
      %v245 = vrot.slane %v243, 1
      %v246 = vor.u32 %v241, %v245
      %v248 = vshrl.u32 %v215, 16
      %v250 = vshll.u32 %v215, 16
      %v252 = vrot.slane %v250, 1
      %v253 = vor.u32 %v248, %v252
      %v255 = vshrl.u32 %v216, 16
      %v257 = vshll.u32 %v216, 16
      %v259 = vrot.slane %v257, 1
      %v260 = vor.u32 %v255, %v259
      %v262 = vshrl.u32 %v217, 16
      %v264 = vshll.u32 %v217, 16
      %v266 = vrot.slane %v264, 1
      %v267 = vor.u32 %v262, %v266
      %v269 = vshrl.u32 %v218, 16
      %v271 = vshll.u32 %v218, 16
      %v273 = vrot.slane %v271, 1
      %v274 = vor.u32 %v269, %v273
      %275 = vrot.lane.b32.xlu0 %v225, 16
      %v276 = vpop.permute.xlu0 %275
      %277 = vrot.lane.b32.xlu0 %v232, 16
      %v278 = vpop.permute.xlu0 %277
      %279 = vrot.lane.b32.xlu0 %v239, 16
      %v280 = vpop.permute.xlu0 %279
      %281 = vrot.lane.b32.xlu0 %v246, 16
      %v282 = vpop.permute.xlu0 %281
      %283 = vrot.lane.b32.xlu0 %v253, 16
      %v284 = vpop.permute.xlu0 %283
      %285 = vrot.lane.b32.xlu0 %v260, 16
      %v286 = vpop.permute.xlu0 %285
      %287 = vrot.lane.b32.xlu0 %v267, 16
      %v288 = vpop.permute.xlu0 %287
      %289 = vrot.lane.b32.xlu0 %v274, 16
      %v290 = vpop.permute.xlu0 %289
      %v299 = vunpack.c.l.b16 %v163
      %v300 = vunpack.c.l.b16 %v164
      %v301 = vunpack.c.l.b16 %v165
      %v302 = vunpack.c.l.b16 %v166
      %v303 = vunpack.c.l.b16 %v167
      %v304 = vunpack.c.l.b16 %v168
      %v305 = vunpack.c.l.b16 %v169
      %v306 = vunpack.c.l.b16 %v170
      %v307 = vpack.c.b16 %v196, %v299
      %v308 = vpack.c.b16 %v198, %v300
      %v309 = vpack.c.b16 %v200, %v301
      %v310 = vpack.c.b16 %v202, %v302
      %v311 = vpack.c.b16 %v204, %v303
      %v312 = vpack.c.b16 %v206, %v304
      %v313 = vpack.c.b16 %v208, %v305
      %v314 = vpack.c.b16 %v210, %v306
      %v315 = vrot.slane %v307, 1
      %v316 = vrot.slane %v308, 1
      %v317 = vrot.slane %v309, 1
      %v318 = vrot.slane %v310, 1
      %v319 = vrot.slane %v311, 1
      %v320 = vrot.slane %v312, 1
      %v321 = vrot.slane %v313, 1
      %v322 = vrot.slane %v314, 1
      %323 = vrot.lane.b32.xlu0 %v315, 32
      %v324 = vpop.permute.xlu0 %323
      %325 = vrot.lane.b32.xlu0 %v316, 32
      %v326 = vpop.permute.xlu0 %325
      %327 = vrot.lane.b32.xlu0 %v317, 32
      %v328 = vpop.permute.xlu0 %327
      %329 = vrot.lane.b32.xlu0 %v318, 32
      %v330 = vpop.permute.xlu0 %329
      %331 = vrot.lane.b32.xlu0 %v319, 32
      %v332 = vpop.permute.xlu0 %331
      %333 = vrot.lane.b32.xlu0 %v320, 32
      %v334 = vpop.permute.xlu0 %333
      %335 = vrot.lane.b32.xlu0 %v321, 32
      %v336 = vpop.permute.xlu0 %335
      %337 = vrot.lane.b32.xlu0 %v322, 32
      %v338 = vpop.permute.xlu0 %337
      %v347 = vunpack.c.l.b16 %v171
      %v348 = vunpack.c.l.b16 %v172
      %v349 = vunpack.c.l.b16 %v173
      %v350 = vunpack.c.l.b16 %v174
      %v351 = vunpack.c.l.b16 %v175
      %v352 = vunpack.c.l.b16 %v176
      %v353 = vunpack.c.l.b16 %v177
      %v354 = vunpack.c.l.b16 %v178
      %v355 = vpack.c.b16 %v347, %v299
      %v356 = vpack.c.b16 %v348, %v300
      %v357 = vpack.c.b16 %v349, %v301
      %v358 = vpack.c.b16 %v350, %v302
      %v359 = vpack.c.b16 %v351, %v303
      %v360 = vpack.c.b16 %v352, %v304
      %v361 = vpack.c.b16 %v353, %v305
      %v362 = vpack.c.b16 %v354, %v306
      %v364 = vshrl.u32 %v355, 16
      %v366 = vrot.slane %v364, 1
      %v367 = vshll.u32 %v355, 16
      %v369 = vrot.slane %v367, 2
      %v370 = vor.u32 %v366, %v369
      %v372 = vshrl.u32 %v356, 16
      %v374 = vrot.slane %v372, 1
      %v375 = vshll.u32 %v356, 16
      %v377 = vrot.slane %v375, 2
      %v378 = vor.u32 %v374, %v377
      %v380 = vshrl.u32 %v357, 16
      %v382 = vrot.slane %v380, 1
      %v383 = vshll.u32 %v357, 16
      %v385 = vrot.slane %v383, 2
      %v386 = vor.u32 %v382, %v385
      %v388 = vshrl.u32 %v358, 16
      %v390 = vrot.slane %v388, 1
      %v391 = vshll.u32 %v358, 16
      %v393 = vrot.slane %v391, 2
      %v394 = vor.u32 %v390, %v393
      %v396 = vshrl.u32 %v359, 16
      %v398 = vrot.slane %v396, 1
      %v399 = vshll.u32 %v359, 16
      %v401 = vrot.slane %v399, 2
      %v402 = vor.u32 %v398, %v401
      %v404 = vshrl.u32 %v360, 16
      %v406 = vrot.slane %v404, 1
      %v407 = vshll.u32 %v360, 16
      %v409 = vrot.slane %v407, 2
      %v410 = vor.u32 %v406, %v409
      %v412 = vshrl.u32 %v361, 16
      %v414 = vrot.slane %v412, 1
      %v415 = vshll.u32 %v361, 16
      %v417 = vrot.slane %v415, 2
      %v418 = vor.u32 %v414, %v417
      %v420 = vshrl.u32 %v362, 16
      %v422 = vrot.slane %v420, 1
      %v423 = vshll.u32 %v362, 16
      %v425 = vrot.slane %v423, 2
      %v426 = vor.u32 %v422, %v425
      %427 = vrot.lane.b32.xlu0 %v370, 48
      %v428 = vpop.permute.xlu0 %427
      %429 = vrot.lane.b32.xlu0 %v378, 48
      %v430 = vpop.permute.xlu0 %429
      %431 = vrot.lane.b32.xlu0 %v386, 48
      %v432 = vpop.permute.xlu0 %431
      %433 = vrot.lane.b32.xlu0 %v394, 48
      %v434 = vpop.permute.xlu0 %433
      %435 = vrot.lane.b32.xlu0 %v402, 48
      %v436 = vpop.permute.xlu0 %435
      %437 = vrot.lane.b32.xlu0 %v410, 48
      %v438 = vpop.permute.xlu0 %437
      %439 = vrot.lane.b32.xlu0 %v418, 48
      %v440 = vpop.permute.xlu0 %439
      %441 = vrot.lane.b32.xlu0 %v426, 48
      %v442 = vpop.permute.xlu0 %441
      %vm443 = vcmask 130048
      %v446 = vsel %vm443, %v147, %v276
      %v449 = vsel %vm443, %v148, %v278
      %v452 = vsel %vm443, %v149, %v280
      %v455 = vsel %vm443, %v150, %v282
      %v458 = vsel %vm443, %v151, %v284
      %v461 = vsel %vm443, %v152, %v286
      %v464 = vsel %vm443, %v153, %v288
      %v467 = vsel %vm443, %v154, %v290
      %vm468 = vcmask 261120
      %v470 = vsel %vm468, %v446, %v324
      %v472 = vsel %vm468, %v449, %v326
      %v474 = vsel %vm468, %v452, %v328
      %v476 = vsel %vm468, %v455, %v330
      %v478 = vsel %vm468, %v458, %v332
      %v480 = vsel %vm468, %v461, %v334
      %v482 = vsel %vm468, %v464, %v336
      %v484 = vsel %vm468, %v467, %v338
      %vm485 = vcmask 392192
      %v487 = vsel %vm485, %v470, %v428
      %v489 = vsel %vm485, %v472, %v430
      %v491 = vsel %vm485, %v474, %v432
      %v493 = vsel %vm485, %v476, %v434
      %v495 = vsel %vm485, %v478, %v436
      %v497 = vsel %vm485, %v480, %v438
      %v499 = vsel %vm485, %v482, %v440
      %v501 = vsel %vm485, %v484, %v442
      %s502 = scalar_lea.vmem %s138, 8
      %v503 = vld [vmem:[%s502] sm:$0xf]
      %v504 = vld [vmem:[%s502 + $0x8] sm:$0xf]
      %v505 = vld [vmem:[%s502 + $0x10] sm:$0xf]
      %v506 = vld [vmem:[%s502 + $0x18] sm:$0xf]
      %v507 = vld [vmem:[%s502 + $0x20] sm:$0xf]
      %v508 = vld [vmem:[%s502 + $0x28] sm:$0xf]
      %v509 = vld [vmem:[%s502 + $0x30] sm:$0xf]
      %v510 = vld [vmem:[%s502 + $0x38] sm:$0xf]
      %v511 = vld [vmem:[%s502 + $0x4] sm:$0x1]
      %v512 = vld [vmem:[%s502 + $0xc] sm:$0x1]
      %v513 = vld [vmem:[%s502 + $0x14] sm:$0x1]
      %v514 = vld [vmem:[%s502 + $0x1c] sm:$0x1]
      %v515 = vld [vmem:[%s502 + $0x24] sm:$0x1]
      %v516 = vld [vmem:[%s502 + $0x2c] sm:$0x1]
      %v517 = vld [vmem:[%s502 + $0x34] sm:$0x1]
      %v518 = vld [vmem:[%s502 + $0x3c] sm:$0x1]
      %v519 = vld [vmem:[%s502] sm:$0xe]
      %v520 = vld [vmem:[%s502 + $0x8] sm:$0xe]
      %v521 = vld [vmem:[%s502 + $0x10] sm:$0xe]
      %v522 = vld [vmem:[%s502 + $0x18] sm:$0xe]
      %v523 = vld [vmem:[%s502 + $0x20] sm:$0xe]
      %v524 = vld [vmem:[%s502 + $0x28] sm:$0xe]
      %v525 = vld [vmem:[%s502 + $0x30] sm:$0xe]
      %v526 = vld [vmem:[%s502 + $0x38] sm:$0xe]
      %v527 = vld [vmem:[%s502 + $0x4] sm:$0x3]
      %v528 = vld [vmem:[%s502 + $0xc] sm:$0x3]
      %v529 = vld [vmem:[%s502 + $0x14] sm:$0x3]
      %v530 = vld [vmem:[%s502 + $0x1c] sm:$0x3]
      %v531 = vld [vmem:[%s502 + $0x24] sm:$0x3]
      %v532 = vld [vmem:[%s502 + $0x2c] sm:$0x3]
      %v533 = vld [vmem:[%s502 + $0x34] sm:$0x3]
      %v534 = vld [vmem:[%s502 + $0x3c] sm:$0x3]
      %v551 = vunpack.c.l.b16 %v503
      %v552 = vunpack.c.l.b16 %v511
      %v553 = vunpack.c.l.b16 %v504
      %v554 = vunpack.c.l.b16 %v512
      %v555 = vunpack.c.l.b16 %v505
      %v556 = vunpack.c.l.b16 %v513
      %v557 = vunpack.c.l.b16 %v506
      %v558 = vunpack.c.l.b16 %v514
      %v559 = vunpack.c.l.b16 %v507
      %v560 = vunpack.c.l.b16 %v515
      %v561 = vunpack.c.l.b16 %v508
      %v562 = vunpack.c.l.b16 %v516
      %v563 = vunpack.c.l.b16 %v509
      %v564 = vunpack.c.l.b16 %v517
      %v565 = vunpack.c.l.b16 %v510
      %v566 = vunpack.c.l.b16 %v518
      %v567 = vpack.c.b16 %v552, %v551
      %v568 = vpack.c.b16 %v554, %v553
      %v569 = vpack.c.b16 %v556, %v555
      %v570 = vpack.c.b16 %v558, %v557
      %v571 = vpack.c.b16 %v560, %v559
      %v572 = vpack.c.b16 %v562, %v561
      %v573 = vpack.c.b16 %v564, %v563
      %v574 = vpack.c.b16 %v566, %v565
      %v576 = vshrl.u32 %v567, 16
      %v578 = vshll.u32 %v567, 16
      %v580 = vrot.slane %v578, 1
      %v581 = vor.u32 %v576, %v580
      %v583 = vshrl.u32 %v568, 16
      %v585 = vshll.u32 %v568, 16
      %v587 = vrot.slane %v585, 1
      %v588 = vor.u32 %v583, %v587
      %v590 = vshrl.u32 %v569, 16
      %v592 = vshll.u32 %v569, 16
      %v594 = vrot.slane %v592, 1
      %v595 = vor.u32 %v590, %v594
      %v597 = vshrl.u32 %v570, 16
      %v599 = vshll.u32 %v570, 16
      %v601 = vrot.slane %v599, 1
      %v602 = vor.u32 %v597, %v601
      %v604 = vshrl.u32 %v571, 16
      %v606 = vshll.u32 %v571, 16
      %v608 = vrot.slane %v606, 1
      %v609 = vor.u32 %v604, %v608
      %v611 = vshrl.u32 %v572, 16
      %v613 = vshll.u32 %v572, 16
      %v615 = vrot.slane %v613, 1
      %v616 = vor.u32 %v611, %v615
      %v618 = vshrl.u32 %v573, 16
      %v620 = vshll.u32 %v573, 16
      %v622 = vrot.slane %v620, 1
      %v623 = vor.u32 %v618, %v622
      %v625 = vshrl.u32 %v574, 16
      %v627 = vshll.u32 %v574, 16
      %v629 = vrot.slane %v627, 1
      %v630 = vor.u32 %v625, %v629
      %631 = vrot.lane.b32.xlu0 %v581, 16
      %v632 = vpop.permute.xlu0 %631
      %633 = vrot.lane.b32.xlu0 %v588, 16
      %v634 = vpop.permute.xlu0 %633
      %635 = vrot.lane.b32.xlu0 %v595, 16
      %v636 = vpop.permute.xlu0 %635
      %637 = vrot.lane.b32.xlu0 %v602, 16
      %v638 = vpop.permute.xlu0 %637
      %639 = vrot.lane.b32.xlu0 %v609, 16
      %v640 = vpop.permute.xlu0 %639
      %641 = vrot.lane.b32.xlu0 %v616, 16
      %v642 = vpop.permute.xlu0 %641
      %643 = vrot.lane.b32.xlu0 %v623, 16
      %v644 = vpop.permute.xlu0 %643
      %645 = vrot.lane.b32.xlu0 %v630, 16
      %v646 = vpop.permute.xlu0 %645
      %v655 = vunpack.c.l.b16 %v519
      %v656 = vunpack.c.l.b16 %v520
      %v657 = vunpack.c.l.b16 %v521
      %v658 = vunpack.c.l.b16 %v522
      %v659 = vunpack.c.l.b16 %v523
      %v660 = vunpack.c.l.b16 %v524
      %v661 = vunpack.c.l.b16 %v525
      %v662 = vunpack.c.l.b16 %v526
      %v663 = vpack.c.b16 %v552, %v655
      %v664 = vpack.c.b16 %v554, %v656
      %v665 = vpack.c.b16 %v556, %v657
      %v666 = vpack.c.b16 %v558, %v658
      %v667 = vpack.c.b16 %v560, %v659
      %v668 = vpack.c.b16 %v562, %v660
      %v669 = vpack.c.b16 %v564, %v661
      %v670 = vpack.c.b16 %v566, %v662
      %v671 = vrot.slane %v663, 1
      %v672 = vrot.slane %v664, 1
      %v673 = vrot.slane %v665, 1
      %v674 = vrot.slane %v666, 1
      %v675 = vrot.slane %v667, 1
      %v676 = vrot.slane %v668, 1
      %v677 = vrot.slane %v669, 1
      %v678 = vrot.slane %v670, 1
      %679 = vrot.lane.b32.xlu0 %v671, 32
      %v680 = vpop.permute.xlu0 %679
      %681 = vrot.lane.b32.xlu0 %v672, 32
      %v682 = vpop.permute.xlu0 %681
      %683 = vrot.lane.b32.xlu0 %v673, 32
      %v684 = vpop.permute.xlu0 %683
      %685 = vrot.lane.b32.xlu0 %v674, 32
      %v686 = vpop.permute.xlu0 %685
      %687 = vrot.lane.b32.xlu0 %v675, 32
      %v688 = vpop.permute.xlu0 %687
      %689 = vrot.lane.b32.xlu0 %v676, 32
      %v690 = vpop.permute.xlu0 %689
      %691 = vrot.lane.b32.xlu0 %v677, 32
      %v692 = vpop.permute.xlu0 %691
      %693 = vrot.lane.b32.xlu0 %v678, 32
      %v694 = vpop.permute.xlu0 %693
      %v703 = vunpack.c.l.b16 %v527
      %v704 = vunpack.c.l.b16 %v528
      %v705 = vunpack.c.l.b16 %v529
      %v706 = vunpack.c.l.b16 %v530
      %v707 = vunpack.c.l.b16 %v531
      %v708 = vunpack.c.l.b16 %v532
      %v709 = vunpack.c.l.b16 %v533
      %v710 = vunpack.c.l.b16 %v534
      %v711 = vpack.c.b16 %v703, %v655
      %v712 = vpack.c.b16 %v704, %v656
      %v713 = vpack.c.b16 %v705, %v657
      %v714 = vpack.c.b16 %v706, %v658
      %v715 = vpack.c.b16 %v707, %v659
      %v716 = vpack.c.b16 %v708, %v660
      %v717 = vpack.c.b16 %v709, %v661
      %v718 = vpack.c.b16 %v710, %v662
      %v720 = vshrl.u32 %v711, 16
      %v722 = vrot.slane %v720, 1
      %v723 = vshll.u32 %v711, 16
      %v725 = vrot.slane %v723, 2
      %v726 = vor.u32 %v722, %v725
      %v728 = vshrl.u32 %v712, 16
      %v730 = vrot.slane %v728, 1
      %v731 = vshll.u32 %v712, 16
      %v733 = vrot.slane %v731, 2
      %v734 = vor.u32 %v730, %v733
      %v736 = vshrl.u32 %v713, 16
      %v738 = vrot.slane %v736, 1
      %v739 = vshll.u32 %v713, 16
      %v741 = vrot.slane %v739, 2
      %v742 = vor.u32 %v738, %v741
      %v744 = vshrl.u32 %v714, 16
      %v746 = vrot.slane %v744, 1
      %v747 = vshll.u32 %v714, 16
      %v749 = vrot.slane %v747, 2
      %v750 = vor.u32 %v746, %v749
      %v752 = vshrl.u32 %v715, 16
      %v754 = vrot.slane %v752, 1
      %v755 = vshll.u32 %v715, 16
      %v757 = vrot.slane %v755, 2
      %v758 = vor.u32 %v754, %v757
      %v760 = vshrl.u32 %v716, 16
      %v762 = vrot.slane %v760, 1
      %v763 = vshll.u32 %v716, 16
      %v765 = vrot.slane %v763, 2
      %v766 = vor.u32 %v762, %v765
      %v768 = vshrl.u32 %v717, 16
      %v770 = vrot.slane %v768, 1
      %v771 = vshll.u32 %v717, 16
      %v773 = vrot.slane %v771, 2
      %v774 = vor.u32 %v770, %v773
      %v776 = vshrl.u32 %v718, 16
      %v778 = vrot.slane %v776, 1
      %v779 = vshll.u32 %v718, 16
      %v781 = vrot.slane %v779, 2
      %v782 = vor.u32 %v778, %v781
      %783 = vrot.lane.b32.xlu0 %v726, 48
      %v784 = vpop.permute.xlu0 %783
      %785 = vrot.lane.b32.xlu0 %v734, 48
      %v786 = vpop.permute.xlu0 %785
      %787 = vrot.lane.b32.xlu0 %v742, 48
      %v788 = vpop.permute.xlu0 %787
      %789 = vrot.lane.b32.xlu0 %v750, 48
      %v790 = vpop.permute.xlu0 %789
      %791 = vrot.lane.b32.xlu0 %v758, 48
      %v792 = vpop.permute.xlu0 %791
      %793 = vrot.lane.b32.xlu0 %v766, 48
      %v794 = vpop.permute.xlu0 %793
      %795 = vrot.lane.b32.xlu0 %v774, 48
      %v796 = vpop.permute.xlu0 %795
      %797 = vrot.lane.b32.xlu0 %v782, 48
      %v798 = vpop.permute.xlu0 %797
      %v801 = vsel %vm443, %v503, %v632
      %v804 = vsel %vm443, %v504, %v634
      %v807 = vsel %vm443, %v505, %v636
      %v810 = vsel %vm443, %v506, %v638
      %v813 = vsel %vm443, %v507, %v640
      %v816 = vsel %vm443, %v508, %v642
      %v819 = vsel %vm443, %v509, %v644
      %v822 = vsel %vm443, %v510, %v646
      %v824 = vsel %vm468, %v801, %v680
      %v826 = vsel %vm468, %v804, %v682
      %v828 = vsel %vm468, %v807, %v684
      %v830 = vsel %vm468, %v810, %v686
      %v832 = vsel %vm468, %v813, %v688
      %v834 = vsel %vm468, %v816, %v690
      %v836 = vsel %vm468, %v819, %v692
      %v838 = vsel %vm468, %v822, %v694
      %v840 = vsel %vm485, %v824, %v784
      %v842 = vsel %vm485, %v826, %v786
      %v844 = vsel %vm485, %v828, %v788
      %v846 = vsel %vm485, %v830, %v790
      %v848 = vsel %vm485, %v832, %v792
      %v850 = vsel %vm485, %v834, %v794
      %v852 = vsel %vm485, %v836, %v796
      %v854 = vsel %vm485, %v838, %v798
      %s855 = scalar_lea.vmem %s138, 16
      %v856 = vld [vmem:[%s855] sm:$0xf]
      %v857 = vld [vmem:[%s855 + $0x8] sm:$0xf]
      %v858 = vld [vmem:[%s855 + $0x10] sm:$0xf]
      %v859 = vld [vmem:[%s855 + $0x18] sm:$0xf]
      %v860 = vld [vmem:[%s855 + $0x20] sm:$0xf]
      %v861 = vld [vmem:[%s855 + $0x28] sm:$0xf]
      %v862 = vld [vmem:[%s855 + $0x30] sm:$0xf]
      %v863 = vld [vmem:[%s855 + $0x38] sm:$0xf]
      %v864 = vld [vmem:[%s855 + $0x4] sm:$0x1]
      %v865 = vld [vmem:[%s855 + $0xc] sm:$0x1]
      %v866 = vld [vmem:[%s855 + $0x14] sm:$0x1]
      %v867 = vld [vmem:[%s855 + $0x1c] sm:$0x1]
      %v868 = vld [vmem:[%s855 + $0x24] sm:$0x1]
      %v869 = vld [vmem:[%s855 + $0x2c] sm:$0x1]
      %v870 = vld [vmem:[%s855 + $0x34] sm:$0x1]
      %v871 = vld [vmem:[%s855 + $0x3c] sm:$0x1]
      %v872 = vld [vmem:[%s855] sm:$0xe]
      %v873 = vld [vmem:[%s855 + $0x8] sm:$0xe]
      %v874 = vld [vmem:[%s855 + $0x10] sm:$0xe]
      %v875 = vld [vmem:[%s855 + $0x18] sm:$0xe]
      %v876 = vld [vmem:[%s855 + $0x20] sm:$0xe]
      %v877 = vld [vmem:[%s855 + $0x28] sm:$0xe]
      %v878 = vld [vmem:[%s855 + $0x30] sm:$0xe]
      %v879 = vld [vmem:[%s855 + $0x38] sm:$0xe]
      %v880 = vld [vmem:[%s855 + $0x4] sm:$0x3]
      %v881 = vld [vmem:[%s855 + $0xc] sm:$0x3]
      %v882 = vld [vmem:[%s855 + $0x14] sm:$0x3]
      %v883 = vld [vmem:[%s855 + $0x1c] sm:$0x3]
      %v884 = vld [vmem:[%s855 + $0x24] sm:$0x3]
      %v885 = vld [vmem:[%s855 + $0x2c] sm:$0x3]
      %v886 = vld [vmem:[%s855 + $0x34] sm:$0x3]
      %v887 = vld [vmem:[%s855 + $0x3c] sm:$0x3]
      %v904 = vunpack.c.l.b16 %v856
      %v905 = vunpack.c.l.b16 %v864
      %v906 = vunpack.c.l.b16 %v857
      %v907 = vunpack.c.l.b16 %v865
      %v908 = vunpack.c.l.b16 %v858
      %v909 = vunpack.c.l.b16 %v866
      %v910 = vunpack.c.l.b16 %v859
      %v911 = vunpack.c.l.b16 %v867
      %v912 = vunpack.c.l.b16 %v860
      %v913 = vunpack.c.l.b16 %v868
      %v914 = vunpack.c.l.b16 %v861
      %v915 = vunpack.c.l.b16 %v869
      %v916 = vunpack.c.l.b16 %v862
      %v917 = vunpack.c.l.b16 %v870
      %v918 = vunpack.c.l.b16 %v863
      %v919 = vunpack.c.l.b16 %v871
      %v920 = vpack.c.b16 %v905, %v904
      %v921 = vpack.c.b16 %v907, %v906
      %v922 = vpack.c.b16 %v909, %v908
      %v923 = vpack.c.b16 %v911, %v910
      %v924 = vpack.c.b16 %v913, %v912
      %v925 = vpack.c.b16 %v915, %v914
      %v926 = vpack.c.b16 %v917, %v916
      %v927 = vpack.c.b16 %v919, %v918
      %v929 = vshrl.u32 %v920, 16
      %v931 = vshll.u32 %v920, 16
      %v933 = vrot.slane %v931, 1
      %v934 = vor.u32 %v929, %v933
      %v936 = vshrl.u32 %v921, 16
      %v938 = vshll.u32 %v921, 16
      %v940 = vrot.slane %v938, 1
      %v941 = vor.u32 %v936, %v940
      %v943 = vshrl.u32 %v922, 16
      %v945 = vshll.u32 %v922, 16
      %v947 = vrot.slane %v945, 1
      %v948 = vor.u32 %v943, %v947
      %v950 = vshrl.u32 %v923, 16
      %v952 = vshll.u32 %v923, 16
      %v954 = vrot.slane %v952, 1
      %v955 = vor.u32 %v950, %v954
      %v957 = vshrl.u32 %v924, 16
      %v959 = vshll.u32 %v924, 16
      %v961 = vrot.slane %v959, 1
      %v962 = vor.u32 %v957, %v961
      %v964 = vshrl.u32 %v925, 16
      %v966 = vshll.u32 %v925, 16
      %v968 = vrot.slane %v966, 1
      %v969 = vor.u32 %v964, %v968
      %v971 = vshrl.u32 %v926, 16
      %v973 = vshll.u32 %v926, 16
      %v975 = vrot.slane %v973, 1
      %v976 = vor.u32 %v971, %v975
      %v978 = vshrl.u32 %v927, 16
      %v980 = vshll.u32 %v927, 16
      %v982 = vrot.slane %v980, 1
      %v983 = vor.u32 %v978, %v982
      %984 = vrot.lane.b32.xlu0 %v934, 16
      %v985 = vpop.permute.xlu0 %984
      %986 = vrot.lane.b32.xlu0 %v941, 16
      %v987 = vpop.permute.xlu0 %986
      %988 = vrot.lane.b32.xlu0 %v948, 16
      %v989 = vpop.permute.xlu0 %988
      %990 = vrot.lane.b32.xlu0 %v955, 16
      %v991 = vpop.permute.xlu0 %990
      %992 = vrot.lane.b32.xlu0 %v962, 16
      %v993 = vpop.permute.xlu0 %992
      %994 = vrot.lane.b32.xlu0 %v969, 16
      %v995 = vpop.permute.xlu0 %994
      %996 = vrot.lane.b32.xlu0 %v976, 16
      %v997 = vpop.permute.xlu0 %996
      %998 = vrot.lane.b32.xlu0 %v983, 16
      %v999 = vpop.permute.xlu0 %998
      %v1008 = vunpack.c.l.b16 %v872
      %v1009 = vunpack.c.l.b16 %v873
      %v1010 = vunpack.c.l.b16 %v874
      %v1011 = vunpack.c.l.b16 %v875
      %v1012 = vunpack.c.l.b16 %v876
      %v1013 = vunpack.c.l.b16 %v877
      %v1014 = vunpack.c.l.b16 %v878
      %v1015 = vunpack.c.l.b16 %v879
      %v1016 = vpack.c.b16 %v905, %v1008
      %v1017 = vpack.c.b16 %v907, %v1009
      %v1018 = vpack.c.b16 %v909, %v1010
      %v1019 = vpack.c.b16 %v911, %v1011
      %v1020 = vpack.c.b16 %v913, %v1012
      %v1021 = vpack.c.b16 %v915, %v1013
      %v1022 = vpack.c.b16 %v917, %v1014
      %v1023 = vpack.c.b16 %v919, %v1015
      %v1024 = vrot.slane %v1016, 1
      %v1025 = vrot.slane %v1017, 1
      %v1026 = vrot.slane %v1018, 1
      %v1027 = vrot.slane %v1019, 1
      %v1028 = vrot.slane %v1020, 1
      %v1029 = vrot.slane %v1021, 1
      %v1030 = vrot.slane %v1022, 1
      %v1031 = vrot.slane %v1023, 1
      %1032 = vrot.lane.b32.xlu0 %v1024, 32
      %v1033 = vpop.permute.xlu0 %1032
      %1034 = vrot.lane.b32.xlu0 %v1025, 32
      %v1035 = vpop.permute.xlu0 %1034
      %1036 = vrot.lane.b32.xlu0 %v1026, 32
      %v1037 = vpop.permute.xlu0 %1036
      %1038 = vrot.lane.b32.xlu0 %v1027, 32
      %v1039 = vpop.permute.xlu0 %1038
      %1040 = vrot.lane.b32.xlu0 %v1028, 32
      %v1041 = vpop.permute.xlu0 %1040
      %1042 = vrot.lane.b32.xlu0 %v1029, 32
      %v1043 = vpop.permute.xlu0 %1042
      %1044 = vrot.lane.b32.xlu0 %v1030, 32
      %v1045 = vpop.permute.xlu0 %1044
      %1046 = vrot.lane.b32.xlu0 %v1031, 32
      %v1047 = vpop.permute.xlu0 %1046
      %v1056 = vunpack.c.l.b16 %v880
      %v1057 = vunpack.c.l.b16 %v881
      %v1058 = vunpack.c.l.b16 %v882
      %v1059 = vunpack.c.l.b16 %v883
      %v1060 = vunpack.c.l.b16 %v884
      %v1061 = vunpack.c.l.b16 %v885
      %v1062 = vunpack.c.l.b16 %v886
      %v1063 = vunpack.c.l.b16 %v887
      %v1064 = vpack.c.b16 %v1056, %v1008
      %v1065 = vpack.c.b16 %v1057, %v1009
      %v1066 = vpack.c.b16 %v1058, %v1010
      %v1067 = vpack.c.b16 %v1059, %v1011
      %v1068 = vpack.c.b16 %v1060, %v1012
      %v1069 = vpack.c.b16 %v1061, %v1013
      %v1070 = vpack.c.b16 %v1062, %v1014
      %v1071 = vpack.c.b16 %v1063, %v1015
      %v1073 = vshrl.u32 %v1064, 16
      %v1075 = vrot.slane %v1073, 1
      %v1076 = vshll.u32 %v1064, 16
      %v1078 = vrot.slane %v1076, 2
      %v1079 = vor.u32 %v1075, %v1078
      %v1081 = vshrl.u32 %v1065, 16
      %v1083 = vrot.slane %v1081, 1
      %v1084 = vshll.u32 %v1065, 16
      %v1086 = vrot.slane %v1084, 2
      %v1087 = vor.u32 %v1083, %v1086
      %v1089 = vshrl.u32 %v1066, 16
      %v1091 = vrot.slane %v1089, 1
      %v1092 = vshll.u32 %v1066, 16
      %v1094 = vrot.slane %v1092, 2
      %v1095 = vor.u32 %v1091, %v1094
      %v1097 = vshrl.u32 %v1067, 16
      %v1099 = vrot.slane %v1097, 1
      %v1100 = vshll.u32 %v1067, 16
      %v1102 = vrot.slane %v1100, 2
      %v1103 = vor.u32 %v1099, %v1102
      %v1105 = vshrl.u32 %v1068, 16
      %v1107 = vrot.slane %v1105, 1
      %v1108 = vshll.u32 %v1068, 16
      %v1110 = vrot.slane %v1108, 2
      %v1111 = vor.u32 %v1107, %v1110
      %v1113 = vshrl.u32 %v1069, 16
      %v1115 = vrot.slane %v1113, 1
      %v1116 = vshll.u32 %v1069, 16
      %v1118 = vrot.slane %v1116, 2
      %v1119 = vor.u32 %v1115, %v1118
      %v1121 = vshrl.u32 %v1070, 16
      %v1123 = vrot.slane %v1121, 1
      %v1124 = vshll.u32 %v1070, 16
      %v1126 = vrot.slane %v1124, 2
      %v1127 = vor.u32 %v1123, %v1126
      %v1129 = vshrl.u32 %v1071, 16
      %v1131 = vrot.slane %v1129, 1
      %v1132 = vshll.u32 %v1071, 16
      %v1134 = vrot.slane %v1132, 2
      %v1135 = vor.u32 %v1131, %v1134
      %1136 = vrot.lane.b32.xlu0 %v1079, 48
      %v1137 = vpop.permute.xlu0 %1136
      %1138 = vrot.lane.b32.xlu0 %v1087, 48
      %v1139 = vpop.permute.xlu0 %1138
      %1140 = vrot.lane.b32.xlu0 %v1095, 48
      %v1141 = vpop.permute.xlu0 %1140
      %1142 = vrot.lane.b32.xlu0 %v1103, 48
      %v1143 = vpop.permute.xlu0 %1142
      %1144 = vrot.lane.b32.xlu0 %v1111, 48
      %v1145 = vpop.permute.xlu0 %1144
      %1146 = vrot.lane.b32.xlu0 %v1119, 48
      %v1147 = vpop.permute.xlu0 %1146
      %1148 = vrot.lane.b32.xlu0 %v1127, 48
      %v1149 = vpop.permute.xlu0 %1148
      %1150 = vrot.lane.b32.xlu0 %v1135, 48
      %v1151 = vpop.permute.xlu0 %1150
      %v1154 = vsel %vm443, %v856, %v985
      %v1157 = vsel %vm443, %v857, %v987
      %v1160 = vsel %vm443, %v858, %v989
      %v1163 = vsel %vm443, %v859, %v991
      %v1166 = vsel %vm443, %v860, %v993
      %v1169 = vsel %vm443, %v861, %v995
      %v1172 = vsel %vm443, %v862, %v997
      %v1175 = vsel %vm443, %v863, %v999
      %v1177 = vsel %vm468, %v1154, %v1033
      %v1179 = vsel %vm468, %v1157, %v1035
      %v1181 = vsel %vm468, %v1160, %v1037
      %v1183 = vsel %vm468, %v1163, %v1039
      %v1185 = vsel %vm468, %v1166, %v1041
      %v1187 = vsel %vm468, %v1169, %v1043
      %v1189 = vsel %vm468, %v1172, %v1045
      %v1191 = vsel %vm468, %v1175, %v1047
      %v1193 = vsel %vm485, %v1177, %v1137
      %v1195 = vsel %vm485, %v1179, %v1139
      %v1197 = vsel %vm485, %v1181, %v1141
      %v1199 = vsel %vm485, %v1183, %v1143
      %v1201 = vsel %vm485, %v1185, %v1145
      %v1203 = vsel %vm485, %v1187, %v1147
      %v1205 = vsel %vm485, %v1189, %v1149
      %v1207 = vsel %vm485, %v1191, %v1151
      %s1208 = scalar_lea.vmem %s138, 24
      %v1209 = vld [vmem:[%s1208] sm:$0xf]
      %v1210 = vld [vmem:[%s1208 + $0x8] sm:$0xf]
      %v1211 = vld [vmem:[%s1208 + $0x10] sm:$0xf]
      %v1212 = vld [vmem:[%s1208 + $0x18] sm:$0xf]
      %v1213 = vld [vmem:[%s1208 + $0x20] sm:$0xf]
      %v1214 = vld [vmem:[%s1208 + $0x28] sm:$0xf]
      %v1215 = vld [vmem:[%s1208 + $0x30] sm:$0xf]
      %v1216 = vld [vmem:[%s1208 + $0x38] sm:$0xf]
      %v1217 = vld [vmem:[%s1208 + $0x4] sm:$0x1]
      %v1218 = vld [vmem:[%s1208 + $0xc] sm:$0x1]
      %v1219 = vld [vmem:[%s1208 + $0x14] sm:$0x1]
      %v1220 = vld [vmem:[%s1208 + $0x1c] sm:$0x1]
      %v1221 = vld [vmem:[%s1208 + $0x24] sm:$0x1]
      %v1222 = vld [vmem:[%s1208 + $0x2c] sm:$0x1]
      %v1223 = vld [vmem:[%s1208 + $0x34] sm:$0x1]
      %v1224 = vld [vmem:[%s1208 + $0x3c] sm:$0x1]
      %v1225 = vld [vmem:[%s1208] sm:$0xe]
      %v1226 = vld [vmem:[%s1208 + $0x8] sm:$0xe]
      %v1227 = vld [vmem:[%s1208 + $0x10] sm:$0xe]
      %v1228 = vld [vmem:[%s1208 + $0x18] sm:$0xe]
      %v1229 = vld [vmem:[%s1208 + $0x20] sm:$0xe]
      %v1230 = vld [vmem:[%s1208 + $0x28] sm:$0xe]
      %v1231 = vld [vmem:[%s1208 + $0x30] sm:$0xe]
      %v1232 = vld [vmem:[%s1208 + $0x38] sm:$0xe]
      %v1233 = vld [vmem:[%s1208 + $0x4] sm:$0x3]
      %v1234 = vld [vmem:[%s1208 + $0xc] sm:$0x3]
      %v1235 = vld [vmem:[%s1208 + $0x14] sm:$0x3]
      %v1236 = vld [vmem:[%s1208 + $0x1c] sm:$0x3]
      %v1237 = vld [vmem:[%s1208 + $0x24] sm:$0x3]
      %v1238 = vld [vmem:[%s1208 + $0x2c] sm:$0x3]
      %v1239 = vld [vmem:[%s1208 + $0x34] sm:$0x3]
      %v1240 = vld [vmem:[%s1208 + $0x3c] sm:$0x3]
      %v1257 = vunpack.c.l.b16 %v1209
      %v1258 = vunpack.c.l.b16 %v1217
      %v1259 = vunpack.c.l.b16 %v1210
      %v1260 = vunpack.c.l.b16 %v1218
      %v1261 = vunpack.c.l.b16 %v1211
      %v1262 = vunpack.c.l.b16 %v1219
      %v1263 = vunpack.c.l.b16 %v1212
      %v1264 = vunpack.c.l.b16 %v1220
      %v1265 = vunpack.c.l.b16 %v1213
      %v1266 = vunpack.c.l.b16 %v1221
      %v1267 = vunpack.c.l.b16 %v1214
      %v1268 = vunpack.c.l.b16 %v1222
      %v1269 = vunpack.c.l.b16 %v1215
      %v1270 = vunpack.c.l.b16 %v1223
      %v1271 = vunpack.c.l.b16 %v1216
      %v1272 = vunpack.c.l.b16 %v1224
      %v1273 = vpack.c.b16 %v1258, %v1257
      %v1274 = vpack.c.b16 %v1260, %v1259
      %v1275 = vpack.c.b16 %v1262, %v1261
      %v1276 = vpack.c.b16 %v1264, %v1263
      %v1277 = vpack.c.b16 %v1266, %v1265
      %v1278 = vpack.c.b16 %v1268, %v1267
      %v1279 = vpack.c.b16 %v1270, %v1269
      %v1280 = vpack.c.b16 %v1272, %v1271
      %v1282 = vshrl.u32 %v1273, 16
      %v1284 = vshll.u32 %v1273, 16
      %v1286 = vrot.slane %v1284, 1
      %v1287 = vor.u32 %v1282, %v1286
      %v1289 = vshrl.u32 %v1274, 16
      %v1291 = vshll.u32 %v1274, 16
      %v1293 = vrot.slane %v1291, 1
      %v1294 = vor.u32 %v1289, %v1293
      %v1296 = vshrl.u32 %v1275, 16
      %v1298 = vshll.u32 %v1275, 16
      %v1300 = vrot.slane %v1298, 1
      %v1301 = vor.u32 %v1296, %v1300
      %v1303 = vshrl.u32 %v1276, 16
      %v1305 = vshll.u32 %v1276, 16
      %v1307 = vrot.slane %v1305, 1
      %v1308 = vor.u32 %v1303, %v1307
      %v1310 = vshrl.u32 %v1277, 16
      %v1312 = vshll.u32 %v1277, 16
      %v1314 = vrot.slane %v1312, 1
      %v1315 = vor.u32 %v1310, %v1314
      %v1317 = vshrl.u32 %v1278, 16
      %v1319 = vshll.u32 %v1278, 16
      %v1321 = vrot.slane %v1319, 1
      %v1322 = vor.u32 %v1317, %v1321
      %v1324 = vshrl.u32 %v1279, 16
      %v1326 = vshll.u32 %v1279, 16
      %v1328 = vrot.slane %v1326, 1
      %v1329 = vor.u32 %v1324, %v1328
      %v1331 = vshrl.u32 %v1280, 16
      %v1333 = vshll.u32 %v1280, 16
      %v1335 = vrot.slane %v1333, 1
      %v1336 = vor.u32 %v1331, %v1335
      %1337 = vrot.lane.b32.xlu0 %v1287, 16
      %v1338 = vpop.permute.xlu0 %1337
      %1339 = vrot.lane.b32.xlu0 %v1294, 16
      %v1340 = vpop.permute.xlu0 %1339
      %1341 = vrot.lane.b32.xlu0 %v1301, 16
      %v1342 = vpop.permute.xlu0 %1341
      %1343 = vrot.lane.b32.xlu0 %v1308, 16
      %v1344 = vpop.permute.xlu0 %1343
      %1345 = vrot.lane.b32.xlu0 %v1315, 16
      %v1346 = vpop.permute.xlu0 %1345
      %1347 = vrot.lane.b32.xlu0 %v1322, 16
      %v1348 = vpop.permute.xlu0 %1347
      %1349 = vrot.lane.b32.xlu0 %v1329, 16
      %v1350 = vpop.permute.xlu0 %1349
      %1351 = vrot.lane.b32.xlu0 %v1336, 16
      %v1352 = vpop.permute.xlu0 %1351
      %v1361 = vunpack.c.l.b16 %v1225
      %v1362 = vunpack.c.l.b16 %v1226
      %v1363 = vunpack.c.l.b16 %v1227
      %v1364 = vunpack.c.l.b16 %v1228
      %v1365 = vunpack.c.l.b16 %v1229
      %v1366 = vunpack.c.l.b16 %v1230
      %v1367 = vunpack.c.l.b16 %v1231
      %v1368 = vunpack.c.l.b16 %v1232
      %v1369 = vpack.c.b16 %v1258, %v1361
      %v1370 = vpack.c.b16 %v1260, %v1362
      %v1371 = vpack.c.b16 %v1262, %v1363
      %v1372 = vpack.c.b16 %v1264, %v1364
      %v1373 = vpack.c.b16 %v1266, %v1365
      %v1374 = vpack.c.b16 %v1268, %v1366
      %v1375 = vpack.c.b16 %v1270, %v1367
      %v1376 = vpack.c.b16 %v1272, %v1368
      %v1377 = vrot.slane %v1369, 1
      %v1378 = vrot.slane %v1370, 1
      %v1379 = vrot.slane %v1371, 1
      %v1380 = vrot.slane %v1372, 1
      %v1381 = vrot.slane %v1373, 1
      %v1382 = vrot.slane %v1374, 1
      %v1383 = vrot.slane %v1375, 1
      %v1384 = vrot.slane %v1376, 1
      %1385 = vrot.lane.b32.xlu0 %v1377, 32
      %v1386 = vpop.permute.xlu0 %1385
      %1387 = vrot.lane.b32.xlu0 %v1378, 32
      %v1388 = vpop.permute.xlu0 %1387
      %1389 = vrot.lane.b32.xlu0 %v1379, 32
      %v1390 = vpop.permute.xlu0 %1389
      %1391 = vrot.lane.b32.xlu0 %v1380, 32
      %v1392 = vpop.permute.xlu0 %1391
      %1393 = vrot.lane.b32.xlu0 %v1381, 32
      %v1394 = vpop.permute.xlu0 %1393
      %1395 = vrot.lane.b32.xlu0 %v1382, 32
      %v1396 = vpop.permute.xlu0 %1395
      %1397 = vrot.lane.b32.xlu0 %v1383, 32
      %v1398 = vpop.permute.xlu0 %1397
      %1399 = vrot.lane.b32.xlu0 %v1384, 32
      %v1400 = vpop.permute.xlu0 %1399
      %v1409 = vunpack.c.l.b16 %v1233
      %v1410 = vunpack.c.l.b16 %v1234
      %v1411 = vunpack.c.l.b16 %v1235
      %v1412 = vunpack.c.l.b16 %v1236
      %v1413 = vunpack.c.l.b16 %v1237
      %v1414 = vunpack.c.l.b16 %v1238
      %v1415 = vunpack.c.l.b16 %v1239
      %v1416 = vunpack.c.l.b16 %v1240
      %v1417 = vpack.c.b16 %v1409, %v1361
      %v1418 = vpack.c.b16 %v1410, %v1362
      %v1419 = vpack.c.b16 %v1411, %v1363
      %v1420 = vpack.c.b16 %v1412, %v1364
      %v1421 = vpack.c.b16 %v1413, %v1365
      %v1422 = vpack.c.b16 %v1414, %v1366
      %v1423 = vpack.c.b16 %v1415, %v1367
      %v1424 = vpack.c.b16 %v1416, %v1368
      %v1426 = vshrl.u32 %v1417, 16
      %v1428 = vrot.slane %v1426, 1
      %v1429 = vshll.u32 %v1417, 16
      %v1431 = vrot.slane %v1429, 2
      %v1432 = vor.u32 %v1428, %v1431
      %v1434 = vshrl.u32 %v1418, 16
      %v1436 = vrot.slane %v1434, 1
      %v1437 = vshll.u32 %v1418, 16
      %v1439 = vrot.slane %v1437, 2
      %v1440 = vor.u32 %v1436, %v1439
      %v1442 = vshrl.u32 %v1419, 16
      %v1444 = vrot.slane %v1442, 1
      %v1445 = vshll.u32 %v1419, 16
      %v1447 = vrot.slane %v1445, 2
      %v1448 = vor.u32 %v1444, %v1447
      %v1450 = vshrl.u32 %v1420, 16
      %v1452 = vrot.slane %v1450, 1
      %v1453 = vshll.u32 %v1420, 16
      %v1455 = vrot.slane %v1453, 2
      %v1456 = vor.u32 %v1452, %v1455
      %v1458 = vshrl.u32 %v1421, 16
      %v1460 = vrot.slane %v1458, 1
      %v1461 = vshll.u32 %v1421, 16
      %v1463 = vrot.slane %v1461, 2
      %v1464 = vor.u32 %v1460, %v1463
      %v1466 = vshrl.u32 %v1422, 16
      %v1468 = vrot.slane %v1466, 1
      %v1469 = vshll.u32 %v1422, 16
      %v1471 = vrot.slane %v1469, 2
      %v1472 = vor.u32 %v1468, %v1471
      %v1474 = vshrl.u32 %v1423, 16
      %v1476 = vrot.slane %v1474, 1
      %v1477 = vshll.u32 %v1423, 16
      %v1479 = vrot.slane %v1477, 2
      %v1480 = vor.u32 %v1476, %v1479
      %v1482 = vshrl.u32 %v1424, 16
      %v1484 = vrot.slane %v1482, 1
      %v1485 = vshll.u32 %v1424, 16
      %v1487 = vrot.slane %v1485, 2
      %v1488 = vor.u32 %v1484, %v1487
      %1489 = vrot.lane.b32.xlu0 %v1432, 48
      %v1490 = vpop.permute.xlu0 %1489
      %1491 = vrot.lane.b32.xlu0 %v1440, 48
      %v1492 = vpop.permute.xlu0 %1491
      %1493 = vrot.lane.b32.xlu0 %v1448, 48
      %v1494 = vpop.permute.xlu0 %1493
      %1495 = vrot.lane.b32.xlu0 %v1456, 48
      %v1496 = vpop.permute.xlu0 %1495
      %1497 = vrot.lane.b32.xlu0 %v1464, 48
      %v1498 = vpop.permute.xlu0 %1497
      %1499 = vrot.lane.b32.xlu0 %v1472, 48
      %v1500 = vpop.permute.xlu0 %1499
      %1501 = vrot.lane.b32.xlu0 %v1480, 48
      %v1502 = vpop.permute.xlu0 %1501
      %1503 = vrot.lane.b32.xlu0 %v1488, 48
      %v1504 = vpop.permute.xlu0 %1503
      %v1507 = vsel %vm443, %v1209, %v1338
      %v1510 = vsel %vm443, %v1210, %v1340
      %v1513 = vsel %vm443, %v1211, %v1342
      %v1516 = vsel %vm443, %v1212, %v1344
      %v1519 = vsel %vm443, %v1213, %v1346
      %v1522 = vsel %vm443, %v1214, %v1348
      %v1525 = vsel %vm443, %v1215, %v1350
      %v1528 = vsel %vm443, %v1216, %v1352
      %v1530 = vsel %vm468, %v1507, %v1386
      %v1532 = vsel %vm468, %v1510, %v1388
      %v1534 = vsel %vm468, %v1513, %v1390
      %v1536 = vsel %vm468, %v1516, %v1392
      %v1538 = vsel %vm468, %v1519, %v1394
      %v1540 = vsel %vm468, %v1522, %v1396
      %v1542 = vsel %vm468, %v1525, %v1398
      %v1544 = vsel %vm468, %v1528, %v1400
      %v1546 = vsel %vm485, %v1530, %v1490
      %v1548 = vsel %vm485, %v1532, %v1492
      %v1550 = vsel %vm485, %v1534, %v1494
      %v1552 = vsel %vm485, %v1536, %v1496
      %v1554 = vsel %vm485, %v1538, %v1498
      %v1556 = vsel %vm485, %v1540, %v1500
      %v1558 = vsel %vm485, %v1542, %v1502
      %v1560 = vsel %vm485, %v1544, %v1504
      %1569 = vrot.lane.b32.xlu0 %v840, 64
      %v1570 = vpop.permute.xlu0 %1569
      %1571 = vrot.lane.b32.xlu0 %v842, 64
      %v1572 = vpop.permute.xlu0 %1571
      %1573 = vrot.lane.b32.xlu0 %v844, 64
      %v1574 = vpop.permute.xlu0 %1573
      %1575 = vrot.lane.b32.xlu0 %v846, 64
      %v1576 = vpop.permute.xlu0 %1575
      %1577 = vrot.lane.b32.xlu0 %v848, 64
      %v1578 = vpop.permute.xlu0 %1577
      %1579 = vrot.lane.b32.xlu0 %v850, 64
      %v1580 = vpop.permute.xlu0 %1579
      %1581 = vrot.lane.b32.xlu0 %v852, 64
      %v1582 = vpop.permute.xlu0 %1581
      %1583 = vrot.lane.b32.xlu0 %v854, 64
      %v1584 = vpop.permute.xlu0 %1583
      %1593 = vrot.lane.b32.xlu0 %v1546, 64
      %v1594 = vpop.permute.xlu0 %1593
      %1595 = vrot.lane.b32.xlu0 %v1548, 64
      %v1596 = vpop.permute.xlu0 %1595
      %1597 = vrot.lane.b32.xlu0 %v1550, 64
      %v1598 = vpop.permute.xlu0 %1597
      %1599 = vrot.lane.b32.xlu0 %v1552, 64
      %v1600 = vpop.permute.xlu0 %1599
      %1601 = vrot.lane.b32.xlu0 %v1554, 64
      %v1602 = vpop.permute.xlu0 %1601
      %1603 = vrot.lane.b32.xlu0 %v1556, 64
      %v1604 = vpop.permute.xlu0 %1603
      %1605 = vrot.lane.b32.xlu0 %v1558, 64
      %v1606 = vpop.permute.xlu0 %1605
      %1607 = vrot.lane.b32.xlu0 %v1560, 64
      %v1608 = vpop.permute.xlu0 %1607
      %vm1609 = vcmask 523264
      %v1611 = vsel %vm1609, %v487, %v1570
      %v1613 = vsel %vm1609, %v489, %v1572
      %v1615 = vsel %vm1609, %v491, %v1574
      %v1617 = vsel %vm1609, %v493, %v1576
      %v1619 = vsel %vm1609, %v495, %v1578
      %v1621 = vsel %vm1609, %v497, %v1580
      %v1623 = vsel %vm1609, %v499, %v1582
      %v1625 = vsel %vm1609, %v501, %v1584
      %v1627 = vsel %vm1609, %v1193, %v1594
      %v1629 = vsel %vm1609, %v1195, %v1596
      %v1631 = vsel %vm1609, %v1197, %v1598
      %v1633 = vsel %vm1609, %v1199, %v1600
      %v1635 = vsel %vm1609, %v1201, %v1602
      %v1637 = vsel %vm1609, %v1203, %v1604
      %v1639 = vsel %vm1609, %v1205, %v1606
      %v1641 = vsel %vm1609, %v1207, %v1608
      %v1658 = vunpack.c.l.b16 %v1611
      %v1659 = vunpack.c.l.b16 %v1627
      %v1660 = vunpack.c.l.b16 %v1613
      %v1661 = vunpack.c.l.b16 %v1629
      %v1662 = vunpack.c.l.b16 %v1615
      %v1663 = vunpack.c.l.b16 %v1631
      %v1664 = vunpack.c.l.b16 %v1617
      %v1665 = vunpack.c.l.b16 %v1633
      %v1666 = vunpack.c.l.b16 %v1619
      %v1667 = vunpack.c.l.b16 %v1635
      %v1668 = vunpack.c.l.b16 %v1621
      %v1669 = vunpack.c.l.b16 %v1637
      %v1670 = vunpack.c.l.b16 %v1623
      %v1671 = vunpack.c.l.b16 %v1639
      %v1672 = vunpack.c.l.b16 %v1625
      %v1673 = vunpack.c.l.b16 %v1641
      %v1674 = vld [vmem:[%s1] sm:$0xf]
      %v1675 = vld [vmem:[%s1 + $0x4] sm:$0xf]
      %v1676 = vld [vmem:[%s1 + $0x8] sm:$0xf]
      %v1677 = vld [vmem:[%s1 + $0xc] sm:$0xf]
      %v1678 = vld [vmem:[%s1 + $0x10] sm:$0xf]
      %v1679 = vld [vmem:[%s1 + $0x14] sm:$0xf]
      %v1680 = vld [vmem:[%s1 + $0x18] sm:$0xf]
      %v1681 = vld [vmem:[%s1 + $0x1c] sm:$0xf]
      %v1682 = vld [vmem:[%s1 + $0x20] sm:$0xf]
      %v1683 = vld [vmem:[%s1 + $0x24] sm:$0xf]
      %v1684 = vld [vmem:[%s1 + $0x28] sm:$0xf]
      %v1685 = vld [vmem:[%s1 + $0x2c] sm:$0xf]
      %v1686 = vld [vmem:[%s1 + $0x30] sm:$0xf]
      %v1687 = vld [vmem:[%s1 + $0x34] sm:$0xf]
      %v1688 = vld [vmem:[%s1 + $0x38] sm:$0xf]
      %v1689 = vld [vmem:[%s1 + $0x3c] sm:$0xf]
      %v1690 = vld [vmem:[%s1 + $0x40] sm:$0xf]
      %v1691 = vld [vmem:[%s1 + $0x44] sm:$0xf]
      %v1692 = vld [vmem:[%s1 + $0x48] sm:$0xf]
      %v1693 = vld [vmem:[%s1 + $0x4c] sm:$0xf]
      %v1694 = vld [vmem:[%s1 + $0x50] sm:$0xf]
      %v1695 = vld [vmem:[%s1 + $0x54] sm:$0xf]
      %v1696 = vld [vmem:[%s1 + $0x58] sm:$0xf]
      %v1697 = vld [vmem:[%s1 + $0x5c] sm:$0xf]
      %v1698 = vld [vmem:[%s1 + $0x60] sm:$0xf]
      %v1699 = vld [vmem:[%s1 + $0x64] sm:$0xf]
      %v1700 = vld [vmem:[%s1 + $0x68] sm:$0xf]
      %v1701 = vld [vmem:[%s1 + $0x6c] sm:$0xf]
      %v1702 = vld [vmem:[%s1 + $0x70] sm:$0xf]
      %v1703 = vld [vmem:[%s1 + $0x74] sm:$0xf]
      %v1704 = vld [vmem:[%s1 + $0x78] sm:$0xf]
      %v1705 = vld [vmem:[%s1 + $0x7c] sm:$0xf]
      %v1706 = vpack.c.b16 %v1660, %v1658
      %v1707 = vpack.c.b16 %v1661, %v1659
      %v1708 = vpack.c.b16 %v1664, %v1662
      %v1709 = vpack.c.b16 %v1665, %v1663
      %v1710 = vpack.c.b16 %v1668, %v1666
      %v1711 = vpack.c.b16 %v1669, %v1667
      %v1712 = vpack.c.b16 %v1672, %v1670
      %v1713 = vpack.c.b16 %v1673, %v1671
      %v1754 = vunpack.c.l.b16 %v1674
      %v1755 = vunpack.c.l.b16 %v1675
      %v1756 = vunpack.c.l.b16 %v1676
      %v1757 = vunpack.c.l.b16 %v1677
      %v1758 = vunpack.c.l.b16 %v1678
      %v1759 = vunpack.c.l.b16 %v1679
      %v1760 = vunpack.c.l.b16 %v1680
      %v1761 = vunpack.c.l.b16 %v1681
      %v1762 = vunpack.c.l.b16 %v1682
      %v1763 = vunpack.c.l.b16 %v1683
      %v1764 = vunpack.c.l.b16 %v1684
      %v1765 = vunpack.c.l.b16 %v1685
      %v1766 = vunpack.c.l.b16 %v1686
      %v1767 = vunpack.c.l.b16 %v1687
      %v1768 = vunpack.c.l.b16 %v1688
      %v1769 = vunpack.c.l.b16 %v1689
      %v1770 = vunpack.c.l.b16 %v1690
      %v1771 = vunpack.c.l.b16 %v1691
      %v1772 = vunpack.c.l.b16 %v1692
      %v1773 = vunpack.c.l.b16 %v1693
      %v1774 = vunpack.c.l.b16 %v1694
      %v1775 = vunpack.c.l.b16 %v1695
      %v1776 = vunpack.c.l.b16 %v1696
      %v1777 = vunpack.c.l.b16 %v1697
      %v1778 = vunpack.c.l.b16 %v1698
      %v1779 = vunpack.c.l.b16 %v1699
      %v1780 = vunpack.c.l.b16 %v1700
      %v1781 = vunpack.c.l.b16 %v1701
      %v1782 = vunpack.c.l.b16 %v1702
      %v1783 = vunpack.c.l.b16 %v1703
      %v1784 = vunpack.c.l.b16 %v1704
      %v1785 = vunpack.c.l.b16 %v1705
      %v1786 = vpack.c.b16 %v1755, %v1754
      %v1787 = vpack.c.b16 %v1757, %v1756
      %v1788 = vpack.c.b16 %v1759, %v1758
      %v1789 = vpack.c.b16 %v1761, %v1760
      %v1790 = vpack.c.b16 %v1763, %v1762
      %v1791 = vpack.c.b16 %v1765, %v1764
      %v1792 = vpack.c.b16 %v1767, %v1766
      %v1793 = vpack.c.b16 %v1769, %v1768
      %v1794 = vpack.c.b16 %v1771, %v1770
      %v1795 = vpack.c.b16 %v1773, %v1772
      %v1796 = vpack.c.b16 %v1775, %v1774
      %v1797 = vpack.c.b16 %v1777, %v1776
      %v1798 = vpack.c.b16 %v1779, %v1778
      %v1799 = vpack.c.b16 %v1781, %v1780
      %v1800 = vpack.c.b16 %v1783, %v1782
      %v1801 = vpack.c.b16 %v1785, %v1784
      %1818 = vmatpush.bf16.msra.mxu0 %v1793
      %1819 = vmatpush.bf16.msra.mxu0 %v1792
      %1820 = vmatpush.bf16.msra.mxu0 %v1791
      %1821 = vmatpush.bf16.msra.mxu0 %v1790
      %1822 = vmatpush.bf16.msra.mxu0 %v1789
      %1823 = vmatpush.bf16.msra.mxu0 %v1788
      %1824 = vmatpush.bf16.msra.mxu0 %v1787
      %1825 = vmatpush.bf16.msra.mxu0 %v1786
      %1826 = vmatmul.bf16.gmra.mxu0 %v1706
      %v1827 = vpop.f32.mrf.mxu0
      %v1828 = vadd.f32 0.0, %v1827
      %v1829 = vpop.f32.mrf.mxu0
      %v1830 = vadd.f32 0.0, %v1829
      %1831 = vmatmul.bf16.gmra.mxu0 %v1708
      %v1832 = vpop.f32.mrf.mxu0
      %v1833 = vadd.f32 0.0, %v1832
      %v1834 = vpop.f32.mrf.mxu0
      %v1835 = vadd.f32 0.0, %v1834
      %1836 = vmatmul.bf16.gmra.mxu0 %v1710
      %v1837 = vpop.f32.mrf.mxu0
      %v1838 = vadd.f32 0.0, %v1837
      %v1839 = vpop.f32.mrf.mxu0
      %v1840 = vadd.f32 0.0, %v1839
      %1841 = vmatmul.bf16.gmra.mxu0 %v1712
      %v1842 = vpop.f32.mrf.mxu0
      %v1843 = vadd.f32 0.0, %v1842
      %v1844 = vpop.f32.mrf.mxu0
      %v1845 = vadd.f32 0.0, %v1844
      %1846 = vdwg.mxu0
      %1847 = vmatpush.bf16.msra.mxu0 %v1801
      %1848 = vmatpush.bf16.msra.mxu0 %v1800
      %1849 = vmatpush.bf16.msra.mxu0 %v1799
      %1850 = vmatpush.bf16.msra.mxu0 %v1798
      %1851 = vmatpush.bf16.msra.mxu0 %v1797
      %1852 = vmatpush.bf16.msra.mxu0 %v1796
      %1853 = vmatpush.bf16.msra.mxu0 %v1795
      %1854 = vmatpush.bf16.msra.mxu0 %v1794
      %1855 = vmatmul.bf16.gmra.mxu0 %v1707
      %v1856 = vpop.f32.mrf.mxu0
      %v1857 = vadd.f32 %v1828, %v1856
      %v1858 = vpop.f32.mrf.mxu0
      %v1859 = vadd.f32 %v1830, %v1858
      %1860 = vmatmul.bf16.gmra.mxu0 %v1709
      %v1861 = vpop.f32.mrf.mxu0
      %v1862 = vadd.f32 %v1833, %v1861
      %v1863 = vpop.f32.mrf.mxu0
      %v1864 = vadd.f32 %v1835, %v1863
      %1865 = vmatmul.bf16.gmra.mxu0 %v1711
      %v1866 = vpop.f32.mrf.mxu0
      %v1867 = vadd.f32 %v1838, %v1866
      %v1868 = vpop.f32.mrf.mxu0
      %v1869 = vadd.f32 %v1840, %v1868
      %1870 = vmatmul.bf16.gmra.mxu0 %v1713
      %v1871 = vpop.f32.mrf.mxu0
      %v1872 = vadd.f32 %v1843, %v1871
      %v1873 = vpop.f32.mrf.mxu0
      %v1874 = vadd.f32 %v1845, %v1873
      %1875 = vdwg.mxu0
      %1876 = vst [vmem:[#allocation3] sm:$0xff] %v1857
      %1877 = vst [vmem:[#allocation3 + $0x8] sm:$0xff] %v1859
      %1878 = vst [vmem:[#allocation3 + $0x10] sm:$0xff] %v1862
      %1879 = vst [vmem:[#allocation3 + $0x18] sm:$0xff] %v1864
      %1880 = vst [vmem:[#allocation3 + $0x20] sm:$0xff] %v1867
      %1881 = vst [vmem:[#allocation3 + $0x28] sm:$0xff] %v1869
      %1882 = vst [vmem:[#allocation3 + $0x30] sm:$0xff] %v1872
      %1883 = vst [vmem:[#allocation3 + $0x38] sm:$0xff] %v1874
      %v1884 = vld [vmem:[#allocation3] ss:$2 sm:$0xf]
      %s1885 = scalar_lea.vmem [#allocation3], 1
      %v1886 = vld [vmem:[%s1885] ss:$2 sm:$0xf]
      %v1888 = vrot.slane %v1886, 7
      %vm1890 = vcmask 1040384
      %v1891 = vsel %vm1890, -3.4028235e+38, %v1888
      %v1892 = vmax.f32 %v1884, %v1886
      %v1893 = vmax.f32 %v1892, %v1891
      %s1894 = scalar_lea.vmem [#allocation2], 4
      %1895 = vst [vmem:[%s1894] sm:$0xf] %v1893
      %s1896 = scalar_lea.vmem [#allocation3], 8
      %v1897 = vld [vmem:[%s1896] ss:$2 sm:$0xf]
      %s1898 = scalar_lea.vmem [#allocation3], 9
      %v1899 = vld [vmem:[%s1898] ss:$2 sm:$0xf]
      %v1901 = vrot.slane %v1899, 7
      %v1903 = vsel %vm1890, -3.4028235e+38, %v1901
      %v1904 = vmax.f32 %v1897, %v1899
      %v1905 = vmax.f32 %v1904, %v1903
      %s1906 = scalar_lea.vmem [#allocation2], 8
      %1907 = vst [vmem:[%s1906] sm:$0xf] %v1905
      %s1908 = scalar_lea.vmem [#allocation3], 16
      %v1909 = vld [vmem:[%s1908] ss:$2 sm:$0xf]
      %s1910 = scalar_lea.vmem [#allocation3], 17
      %v1911 = vld [vmem:[%s1910] ss:$2 sm:$0xf]
      %v1913 = vrot.slane %v1911, 7
      %v1915 = vsel %vm1890, -3.4028235e+38, %v1913
      %v1916 = vmax.f32 %v1909, %v1911
      %v1917 = vmax.f32 %v1916, %v1915
      %s1918 = scalar_lea.vmem [#allocation2], 12
      %1919 = vst [vmem:[%s1918] sm:$0xf] %v1917
      %s1920 = scalar_lea.vmem [#allocation3], 24
      %v1921 = vld [vmem:[%s1920] ss:$2 sm:$0xf]
      %s1922 = scalar_lea.vmem [#allocation3], 25
      %v1923 = vld [vmem:[%s1922] ss:$2 sm:$0xf]
      %v1925 = vrot.slane %v1923, 7
      %v1927 = vsel %vm1890, -3.4028235e+38, %v1925
      %v1928 = vmax.f32 %v1921, %v1923
      %v1929 = vmax.f32 %v1928, %v1927
      %s1930 = scalar_lea.vmem [#allocation2], 16
      %1931 = vst [vmem:[%s1930] sm:$0xf] %v1929
      %s1932 = scalar_lea.vmem [#allocation3], 32
      %v1933 = vld [vmem:[%s1932] ss:$2 sm:$0xf]
      %s1934 = scalar_lea.vmem [#allocation3], 33
      %v1935 = vld [vmem:[%s1934] ss:$2 sm:$0xf]
      %v1937 = vrot.slane %v1935, 7
      %v1939 = vsel %vm1890, -3.4028235e+38, %v1937
      %v1940 = vmax.f32 %v1933, %v1935
      %v1941 = vmax.f32 %v1940, %v1939
      %s1942 = scalar_lea.vmem [#allocation2], 20
      %1943 = vst [vmem:[%s1942] sm:$0xf] %v1941
      %s1944 = scalar_lea.vmem [#allocation3], 40
      %v1945 = vld [vmem:[%s1944] ss:$2 sm:$0xf]
      %s1946 = scalar_lea.vmem [#allocation3], 41
      %v1947 = vld [vmem:[%s1946] ss:$2 sm:$0xf]
      %v1949 = vrot.slane %v1947, 7
      %v1951 = vsel %vm1890, -3.4028235e+38, %v1949
      %v1952 = vmax.f32 %v1945, %v1947
      %v1953 = vmax.f32 %v1952, %v1951
      %s1954 = scalar_lea.vmem [#allocation2], 24
      %1955 = vst [vmem:[%s1954] sm:$0xf] %v1953
      %s1956 = scalar_lea.vmem [#allocation3], 48
      %v1957 = vld [vmem:[%s1956] ss:$2 sm:$0xf]
      %s1958 = scalar_lea.vmem [#allocation3], 49
      %v1959 = vld [vmem:[%s1958] ss:$2 sm:$0xf]
      %v1961 = vrot.slane %v1959, 7
      %v1963 = vsel %vm1890, -3.4028235e+38, %v1961
      %v1964 = vmax.f32 %v1957, %v1959
      %v1965 = vmax.f32 %v1964, %v1963
      %s1966 = scalar_lea.vmem [#allocation2], 28
      %1967 = vst [vmem:[%s1966] sm:$0xf] %v1965
      %s1968 = scalar_lea.vmem [#allocation3], 56
      %v1969 = vld [vmem:[%s1968] ss:$2 sm:$0xf]
      %s1970 = scalar_lea.vmem [#allocation3], 57
      %v1971 = vld [vmem:[%s1970] ss:$2 sm:$0xf]
      %v1973 = vrot.slane %v1971, 7
      %v1975 = vsel %vm1890, -3.4028235e+38, %v1973
      %v1976 = vmax.f32 %v1969, %v1971
      %v1977 = vmax.f32 %v1976, %v1975
      %s1978 = scalar_lea.vmem [#allocation2], 32
      %1979 = vst [vmem:[%s1978] sm:$0xf] %v1977
      loop: start=0, step=1, limit=4
      $region29: #{stem_b_forward.1} parent=27 // loop_pre_header
        _
      $region30: #{stem_b_forward.1} parent=27 // loop_header
        %s1981 = sphi 0, %s1985
        %p1982 = scmp.ge.s32.totalorder %s1981, 4
      $region31: #{stem_b_forward.1} parent=27 // loop_header_branch
        %1984 = sbr.rel (%p1982) target = $region35
      $region32: #{stem_b_forward.1} parent=27 // loop_body
        %s1986 = smul.u32 %s1981, 2
        %s1987 = smul.u32 %s1986, 4
        %s1988 = scalar_lea.vmem [#allocation2], %s1987
        %v1989 = vld [vmem:[%s1988] sm:$0xf]
        %s1990 = sadd.s32 %s1986, 1
        %s1991 = smul.u32 %s1990, 4
        %s1992 = scalar_lea.vmem [#allocation2], %s1991
        %v1993 = vld [vmem:[%s1992] sm:$0xf]
        %v1994 = vmax.f32 %v1989, %v1993
        %s1995 = sadd.s32 %s1986, 2
        %s1996 = smul.u32 %s1995, 4
        %s1997 = scalar_lea.vmem [#allocation2], %s1996
        %v1998 = vld [vmem:[%s1997] sm:$0xf]
        %v1999 = vmax.f32 %v1994, %v1998
        %s2000 = smul.u32 %s1981, 4
        %s2001 = scalar_lea.vmem %s143, %s2000
        %2002 = vst [vmem:[%s2001] sm:$0xf] %v1999
      $region33: #{stem_b_forward.1} parent=27 // loop_footer
        %s1985 = sadd.s32 1, %s1981
      $region34: #{stem_b_forward.1} parent=27 // loop_footer_branch
        %1980 = sbr.rel target = $region30
      $region35: #{stem_b_forward.1} parent=27 // loop_exit
        _
      %p2003 = scmp.lt.s32.totalorder %s13, 1
      %s2004 = scalar_select %p2003, %s13, 1
      %s2005 = smul.addr %s2004, 4
      %s2006 = smul.addr %s2005, 4
      %s2007 = scalar_lea.vmem %s2, %s2006
      // Predicated region
      $region36: #{stem_b_forward.1} parent=27 // pred_check
        %p2008 = pneg %p78
      $region37: #{stem_b_forward.1} parent=27 // pred_check_branch
        %2010 = sbr.rel (%p2008) target = $region39
      $region38: #{stem_b_forward.1} parent=27 // pred_region
        _
      $region39: #{stem_b_forward.1} parent=27 // pred_fallthru
        _
    $region28: #{stem_b_forward.1} parent=5 // pred_fallthru
      _
    %p2011 = scmp.le.s32.totalorder 2, %s8
    // Predicated region
    $region40: #{stem_b_forward.1} parent=5 // pred_check
      %p2012 = pneg %p2011
    $region41: #{stem_b_forward.1} parent=5 // pred_check_branch
      %2014 = sbr.rel (%p2012) target = $region43
    $region42: #{stem_b_forward.1} parent=5 // pred_region
      %s2015 = ssub.s32 %s8, 2
      // Predicated region
      $region44: #{stem_b_forward.1} parent=42 // pred_check
        %p2016 = pneg %p84
      $region45: #{stem_b_forward.1} parent=42 // pred_check_branch
        %2018 = sbr.rel (%p2016) target = $region47
      $region46: #{stem_b_forward.1} parent=42 // pred_region
        %p2019 = scmp.lt.s32.totalorder %s14, 1
        %s2020 = scalar_select %p2019, %s14, 1
        %s2021 = smul.addr %s2020, 4
        %s2022 = smul.addr %s2021, 4
        %s2023 = scalar_lea.vmem %s2, %s2022
      $region47: #{stem_b_forward.1} parent=42 // pred_fallthru
        _
    $region43: #{stem_b_forward.1} parent=5 // pred_fallthru
      _
  $region6: #{stem_b_forward.1} parent=0 // loop_footer
    %s12 = sadd.s32 1, %s8
  $region7: #{stem_b_forward.1} parent=0 // loop_footer_branch
    %7 = sbr.rel target = $region3
  $region8: #{stem_b_forward.1} parent=0 // loop_exit
    _

</llo_original>
